<compile_context>
chip_gen: v7x
topology: tpu7x:2x2x1
jax: 0.10.0
libtpu: 0.0.40
codegen_flags: <defaults>
</compile_context>

<pallas_src>
import functools
import math

import jax
import jax.numpy as jnp
from jax.experimental import pallas as pl
from jax.experimental.pallas import tpu as pltpu


def _round_up(a: int, b: int) -> int:
    return ((a + b - 1) // b) * b


def _posenc_kernel(x_ref, o_ref, *, freqs, C):
    """One tile: x_ref (C, T) -> o_ref (C*(1+2F), T), T a multiple of 128 lanes.

    Row layout of o_ref (== PyTorch feature-column order):
        rows [0, C)                         : x
        rows [C + 2kC, C + 2kC + C)         : sin(f_k * x)
        rows [C + (2k+1)C, C + (2k+2)C)     : cos(f_k * x)
    """
    x = x_ref[...].astype(jnp.float32)          # compute in f32 on every generation
    o_ref[0:C, :] = x.astype(o_ref.dtype)
    row = C
    for f in freqs:                             # compile-time unrolled (F is small)
        fx = jnp.float32(f) * x
        o_ref[row:row + C, :] = jnp.sin(fx).astype(o_ref.dtype)
        o_ref[row + C:row + 2 * C, :] = jnp.cos(fx).astype(o_ref.dtype)
        row += 2 * C


def make_embedding(N_freqs: int = 10, logscale: bool = True,
                   out_dtype=None, channel_major: bool = False):
    """Returns callable(x: [..., C]) -> [..., C * (1 + 2*N_freqs)].

    out_dtype:      dtype of the (dominant) encoded output; defaults to x.dtype.
                    bf16 halves the HBM write traffic; sin/cos still run in f32.
    channel_major:  if True, return shape (C*(1+2F),) + x.shape[:-1] — the
                    kernel's native layout — and skip the final XLA transpose.
    """
    if logscale:
        freq_bands = 2.0 ** jnp.linspace(0.0, N_freqs - 1, N_freqs)
    else:
        freq_bands = jnp.linspace(1.0, 2.0 ** (N_freqs - 1), N_freqs)
    freqs = tuple(float(f) for f in jax.device_get(freq_bands.astype(jnp.float32)))
    K = 1 + 2 * N_freqs

    def embed(x):
        lead = x.shape[:-1]
        C = x.shape[-1]
        N = math.prod(lead)
        KC = K * C
        odt = jnp.dtype(out_dtype) if out_dtype is not None else jnp.dtype(x.dtype)
        kernel = functools.partial(_posenc_kernel, freqs=freqs, C=C)

        # ---------------- tile selection ----------------
        LANE = 128
        # Double-buffered VMEM bytes per lane-column of one grid step
        # (sublane dims pad to 8; dtype-dependent sublane packing is irrelevant
        # here because both sublane dims are full-array dims).
        out_row_b = _round_up(KC, 8) * odt.itemsize
        in_row_b = _round_up(C, 8) * jnp.dtype(x.dtype).itemsize
        budget = 20 * 1024 * 1024                 # well inside the 32 MiB scoped limit
        max_tile = max(LANE, (budget // (2 * (out_row_b + in_row_b))) // LANE * LANE)

        cols = _round_up(max(N, 1), LANE)
        # >= 4 grid steps (2 per v7x TensorCore) when there is enough work, and an
        # even step count when possible so neither core idles on the tail.
        n_steps = max(pl.cdiv(cols, max_tile), min(4, cols // LANE))
        if n_steps > 1 and n_steps % 2:
            n_steps += 1
        tile = _round_up(pl.cdiv(cols, n_steps), LANE)
        Np = _round_up(cols, tile)
        grid = Np // tile

        # ------------- channel-major input view -------------
        # Input is only 1/K of the output bytes, so this transpose (and the pad,
        # done only when actually needed) is cheap layout plumbing.
        xT = x.reshape(N, C).T                     # (C, N)
        if Np != N:
            xT = jnp.pad(xT, ((0, 0), (0, Np - N)))

        cost = pl.CostEstimate(
            flops=int(N_freqs * C * Np),
            transcendentals=int(2 * N_freqs * C * Np),
            bytes_accessed=int(C * Np * jnp.dtype(x.dtype).itemsize
                               + KC * Np * odt.itemsize),
        )

        out_cm = pl.pallas_call(
            kernel,
            out_shape=jax.ShapeDtypeStruct((KC, Np), odt),
            grid_spec=pltpu.PrefetchScalarGridSpec(
                num_scalar_prefetch=0,
                grid=(grid,),
                in_specs=[pl.BlockSpec((C, tile), lambda i: (0, i))],
                out_specs=pl.BlockSpec((KC, tile), lambda i: (0, i)),
            ),
            compiler_params=pltpu.CompilerParams(
                dimension_semantics=("parallel",),
                vmem_limit_bytes=32 * 1024 * 1024,
            ),
            cost_estimate=cost,
        )(xT)                                       # (K*C, Np), channel-major

        if channel_major:
            out = out_cm[:, :N] if Np != N else out_cm
            return out.reshape((KC,) + lead)

        # Single XLA slice+transpose pass back to the PyTorch (..., K*C) layout.
        # TODO(synk): eliminate by fusing into the consumer / channel_major=True.
        out = out_cm[:, :N].T if Np != N else out_cm.T
        return out.reshape(lead + (KC,))

    return embed


def _reference_embed(x, N_freqs=10, logscale=True):
    """Pure-JAX reference mirroring the PyTorch forward."""
    if logscale:
        freq_bands = 2.0 ** jnp.linspace(0.0, N_freqs - 1, N_freqs)
    else:
        freq_bands = jnp.linspace(1.0, 2.0 ** (N_freqs - 1), N_freqs)
    out = [x]
    for f in freq_bands:
        out.append(jnp.sin(f * x))
        out.append(jnp.cos(f * x))
    return jnp.concatenate(out, axis=-1)


if __name__ == "__main__":
    key = jax.random.PRNGKey(0)
    N_freqs = 10
    B, S, C = 2, 100, 3   # small NeRF-style batch of normalized 3-D coordinates
    x = jax.random.uniform(key, (B, S, C), dtype=jnp.float32,
                           minval=-1.0, maxval=1.0)

    embed = make_embedding(N_freqs=N_freqs, logscale=True)
    out = jax.block_until_ready(embed(x))

    ref = _reference_embed(x, N_freqs=N_freqs, logscale=True)
    assert out.shape == (B, S, C * (1 + 2 * N_freqs)), out.shape
    assert out.dtype == x.dtype
    # Exact sin/cos (no recurrence): only vendor-sin ulp differences remain at
    # |arg| <= 2**(N_freqs-1), so the tolerance is tight again.
    err = float(jnp.max(jnp.abs(out - ref)))
    assert err < 2e-5, err

    # Channel-major fast path (no final transpose) must carry the same values.
    out_cm = jax.block_until_ready(
        make_embedding(N_freqs=N_freqs, logscale=True, channel_major=True)(x))
    assert out_cm.shape == (C * (1 + 2 * N_freqs), B, S), out_cm.shape
    err_cm = float(jnp.max(jnp.abs(jnp.moveaxis(out_cm, 0, -1) - ref)))
    assert err_cm < 2e-5, err_cm

    print("KERNEL_OK")
</pallas_src>

<mosaic_0001>
module attributes {stable_mosaic.version = 11 : i64} {
  func.func @_posenc_kernel(%arg0: i32, %arg1: memref<3x128xf32, #tpu.memory_space<vmem>>, %arg2: memref<63x128xf32, #tpu.memory_space<vmem>>) attributes {dimension_semantics = [#tpu.dimension_semantics<parallel>], iteration_bounds = array<i64: 2>, scalar_prefetch = 0 : i64, scratch_operands = 0 : i64, tpu.core_type = #tpu.core_type<tc>, window_params = [{transform_indices = @transform_0, window_bounds = array<i64: 3, 128>}, {transform_indices = @transform_1, window_bounds = array<i64: 63, 128>}]} {
    %c0 = arith.constant 0 : index
    %c0_0 = arith.constant 0 : index
    %0 = vector.load %arg1[%c0, %c0_0] : memref<3x128xf32, #tpu.memory_space<vmem>>, vector<3x128xf32>
    %c0_1 = arith.constant 0 : index
    %c0_2 = arith.constant 0 : index
    %1 = vector.load %arg2[%c0_1, %c0_2] : memref<63x128xf32, #tpu.memory_space<vmem>>, vector<3x128xf32>
    tpu.vector_store %arg2[%c0_1, %c0_2], %0 {strides = array<i32>} : memref<63x128xf32, #tpu.memory_space<vmem>>, vector<3x128xf32>,
    %cst = arith.constant 1.000000e+00 : f32
    %2 = vector.broadcast %cst : f32 to vector<3x128xf32>
    %3 = arith.mulf %2, %0 : vector<3x128xf32>
    %4 = math.sin %3 : vector<3x128xf32>
    %c3 = arith.constant 3 : index
    %c0_3 = arith.constant 0 : index
    %5 = vector.load %arg2[%c3, %c0_3] : memref<63x128xf32, #tpu.memory_space<vmem>>, vector<3x128xf32>
    tpu.vector_store %arg2[%c3, %c0_3], %4 {strides = array<i32>} : memref<63x128xf32, #tpu.memory_space<vmem>>, vector<3x128xf32>,
    %6 = math.cos %3 : vector<3x128xf32>
    %c6 = arith.constant 6 : index
    %c0_4 = arith.constant 0 : index
    %7 = vector.load %arg2[%c6, %c0_4] : memref<63x128xf32, #tpu.memory_space<vmem>>, vector<3x128xf32>
    tpu.vector_store %arg2[%c6, %c0_4], %6 {strides = array<i32>} : memref<63x128xf32, #tpu.memory_space<vmem>>, vector<3x128xf32>,
    %cst_5 = arith.constant 2.000000e+00 : f32
    %8 = vector.broadcast %cst_5 : f32 to vector<3x128xf32>
    %9 = arith.mulf %8, %0 : vector<3x128xf32>
    %10 = math.sin %9 : vector<3x128xf32>
    %c9 = arith.constant 9 : index
    %c0_6 = arith.constant 0 : index
    %11 = vector.load %arg2[%c9, %c0_6] : memref<63x128xf32, #tpu.memory_space<vmem>>, vector<3x128xf32>
    tpu.vector_store %arg2[%c9, %c0_6], %10 {strides = array<i32>} : memref<63x128xf32, #tpu.memory_space<vmem>>, vector<3x128xf32>,
    %12 = math.cos %9 : vector<3x128xf32>
    %c12 = arith.constant 12 : index
    %c0_7 = arith.constant 0 : index
    %13 = vector.load %arg2[%c12, %c0_7] : memref<63x128xf32, #tpu.memory_space<vmem>>, vector<3x128xf32>
    tpu.vector_store %arg2[%c12, %c0_7], %12 {strides = array<i32>} : memref<63x128xf32, #tpu.memory_space<vmem>>, vector<3x128xf32>,
    %cst_8 = arith.constant 4.000000e+00 : f32
    %14 = vector.broadcast %cst_8 : f32 to vector<3x128xf32>
    %15 = arith.mulf %14, %0 : vector<3x128xf32>
    %16 = math.sin %15 : vector<3x128xf32>
    %c15 = arith.constant 15 : index
    %c0_9 = arith.constant 0 : index
    %17 = vector.load %arg2[%c15, %c0_9] : memref<63x128xf32, #tpu.memory_space<vmem>>, vector<3x128xf32>
    tpu.vector_store %arg2[%c15, %c0_9], %16 {strides = array<i32>} : memref<63x128xf32, #tpu.memory_space<vmem>>, vector<3x128xf32>,
    %18 = math.cos %15 : vector<3x128xf32>
    %c18 = arith.constant 18 : index
    %c0_10 = arith.constant 0 : index
    %19 = vector.load %arg2[%c18, %c0_10] : memref<63x128xf32, #tpu.memory_space<vmem>>, vector<3x128xf32>
    tpu.vector_store %arg2[%c18, %c0_10], %18 {strides = array<i32>} : memref<63x128xf32, #tpu.memory_space<vmem>>, vector<3x128xf32>,
    %cst_11 = arith.constant 8.000000e+00 : f32
    %20 = vector.broadcast %cst_11 : f32 to vector<3x128xf32>
    %21 = arith.mulf %20, %0 : vector<3x128xf32>
    %22 = math.sin %21 : vector<3x128xf32>
    %c21 = arith.constant 21 : index
    %c0_12 = arith.constant 0 : index
    %23 = vector.load %arg2[%c21, %c0_12] : memref<63x128xf32, #tpu.memory_space<vmem>>, vector<3x128xf32>
    tpu.vector_store %arg2[%c21, %c0_12], %22 {strides = array<i32>} : memref<63x128xf32, #tpu.memory_space<vmem>>, vector<3x128xf32>,
    %24 = math.cos %21 : vector<3x128xf32>
    %c24 = arith.constant 24 : index
    %c0_13 = arith.constant 0 : index
    %25 = vector.load %arg2[%c24, %c0_13] : memref<63x128xf32, #tpu.memory_space<vmem>>, vector<3x128xf32>
    tpu.vector_store %arg2[%c24, %c0_13], %24 {strides = array<i32>} : memref<63x128xf32, #tpu.memory_space<vmem>>, vector<3x128xf32>,
    %cst_14 = arith.constant 1.600000e+01 : f32
    %26 = vector.broadcast %cst_14 : f32 to vector<3x128xf32>
    %27 = arith.mulf %26, %0 : vector<3x128xf32>
    %28 = math.sin %27 : vector<3x128xf32>
    %c27 = arith.constant 27 : index
    %c0_15 = arith.constant 0 : index
    %29 = vector.load %arg2[%c27, %c0_15] : memref<63x128xf32, #tpu.memory_space<vmem>>, vector<3x128xf32>
    tpu.vector_store %arg2[%c27, %c0_15], %28 {strides = array<i32>} : memref<63x128xf32, #tpu.memory_space<vmem>>, vector<3x128xf32>,
    %30 = math.cos %27 : vector<3x128xf32>
    %c30 = arith.constant 30 : index
    %c0_16 = arith.constant 0 : index
    %31 = vector.load %arg2[%c30, %c0_16] : memref<63x128xf32, #tpu.memory_space<vmem>>, vector<3x128xf32>
    tpu.vector_store %arg2[%c30, %c0_16], %30 {strides = array<i32>} : memref<63x128xf32, #tpu.memory_space<vmem>>, vector<3x128xf32>,
    %cst_17 = arith.constant 3.200000e+01 : f32
    %32 = vector.broadcast %cst_17 : f32 to vector<3x128xf32>
    %33 = arith.mulf %32, %0 : vector<3x128xf32>
    %34 = math.sin %33 : vector<3x128xf32>
    %c33 = arith.constant 33 : index
    %c0_18 = arith.constant 0 : index
    %35 = vector.load %arg2[%c33, %c0_18] : memref<63x128xf32, #tpu.memory_space<vmem>>, vector<3x128xf32>
    tpu.vector_store %arg2[%c33, %c0_18], %34 {strides = array<i32>} : memref<63x128xf32, #tpu.memory_space<vmem>>, vector<3x128xf32>,
    %36 = math.cos %33 : vector<3x128xf32>
    %c36 = arith.constant 36 : index
    %c0_19 = arith.constant 0 : index
    %37 = vector.load %arg2[%c36, %c0_19] : memref<63x128xf32, #tpu.memory_space<vmem>>, vector<3x128xf32>
    tpu.vector_store %arg2[%c36, %c0_19], %36 {strides = array<i32>} : memref<63x128xf32, #tpu.memory_space<vmem>>, vector<3x128xf32>,
    %cst_20 = arith.constant 6.400000e+01 : f32
    %38 = vector.broadcast %cst_20 : f32 to vector<3x128xf32>
    %39 = arith.mulf %38, %0 : vector<3x128xf32>
    %40 = math.sin %39 : vector<3x128xf32>
    %c39 = arith.constant 39 : index
    %c0_21 = arith.constant 0 : index
    %41 = vector.load %arg2[%c39, %c0_21] : memref<63x128xf32, #tpu.memory_space<vmem>>, vector<3x128xf32>
    tpu.vector_store %arg2[%c39, %c0_21], %40 {strides = array<i32>} : memref<63x128xf32, #tpu.memory_space<vmem>>, vector<3x128xf32>,
    %42 = math.cos %39 : vector<3x128xf32>
    %c42 = arith.constant 42 : index
    %c0_22 = arith.constant 0 : index
    %43 = vector.load %arg2[%c42, %c0_22] : memref<63x128xf32, #tpu.memory_space<vmem>>, vector<3x128xf32>
    tpu.vector_store %arg2[%c42, %c0_22], %42 {strides = array<i32>} : memref<63x128xf32, #tpu.memory_space<vmem>>, vector<3x128xf32>,
    %cst_23 = arith.constant 1.280000e+02 : f32
    %44 = vector.broadcast %cst_23 : f32 to vector<3x128xf32>
    %45 = arith.mulf %44, %0 : vector<3x128xf32>
    %46 = math.sin %45 : vector<3x128xf32>
    %c45 = arith.constant 45 : index
    %c0_24 = arith.constant 0 : index
    %47 = vector.load %arg2[%c45, %c0_24] : memref<63x128xf32, #tpu.memory_space<vmem>>, vector<3x128xf32>
    tpu.vector_store %arg2[%c45, %c0_24], %46 {strides = array<i32>} : memref<63x128xf32, #tpu.memory_space<vmem>>, vector<3x128xf32>,
    %48 = math.cos %45 : vector<3x128xf32>
    %c48 = arith.constant 48 : index
    %c0_25 = arith.constant 0 : index
    %49 = vector.load %arg2[%c48, %c0_25] : memref<63x128xf32, #tpu.memory_space<vmem>>, vector<3x128xf32>
    tpu.vector_store %arg2[%c48, %c0_25], %48 {strides = array<i32>} : memref<63x128xf32, #tpu.memory_space<vmem>>, vector<3x128xf32>,
    %cst_26 = arith.constant 2.560000e+02 : f32
    %50 = vector.broadcast %cst_26 : f32 to vector<3x128xf32>
    %51 = arith.mulf %50, %0 : vector<3x128xf32>
    %52 = math.sin %51 : vector<3x128xf32>
    %c51 = arith.constant 51 : index
    %c0_27 = arith.constant 0 : index
    %53 = vector.load %arg2[%c51, %c0_27] : memref<63x128xf32, #tpu.memory_space<vmem>>, vector<3x128xf32>
    tpu.vector_store %arg2[%c51, %c0_27], %52 {strides = array<i32>} : memref<63x128xf32, #tpu.memory_space<vmem>>, vector<3x128xf32>,
    %54 = math.cos %51 : vector<3x128xf32>
    %c54 = arith.constant 54 : index
    %c0_28 = arith.constant 0 : index
    %55 = vector.load %arg2[%c54, %c0_28] : memref<63x128xf32, #tpu.memory_space<vmem>>, vector<3x128xf32>
    tpu.vector_store %arg2[%c54, %c0_28], %54 {strides = array<i32>} : memref<63x128xf32, #tpu.memory_space<vmem>>, vector<3x128xf32>,
    %cst_29 = arith.constant 5.120000e+02 : f32
    %56 = vector.broadcast %cst_29 : f32 to vector<3x128xf32>
    %57 = arith.mulf %56, %0 : vector<3x128xf32>
    %58 = math.sin %57 : vector<3x128xf32>
    %c57 = arith.constant 57 : index
    %c0_30 = arith.constant 0 : index
    %59 = vector.load %arg2[%c57, %c0_30] : memref<63x128xf32, #tpu.memory_space<vmem>>, vector<3x128xf32>
    tpu.vector_store %arg2[%c57, %c0_30], %58 {strides = array<i32>} : memref<63x128xf32, #tpu.memory_space<vmem>>, vector<3x128xf32>,
    %60 = math.cos %57 : vector<3x128xf32>
    %c60 = arith.constant 60 : index
    %c0_31 = arith.constant 0 : index
    %61 = vector.load %arg2[%c60, %c0_31] : memref<63x128xf32, #tpu.memory_space<vmem>>, vector<3x128xf32>
    tpu.vector_store %arg2[%c60, %c0_31], %60 {strides = array<i32>} : memref<63x128xf32, #tpu.memory_space<vmem>>, vector<3x128xf32>,
    return
  }
  func.func @transform_0(%arg0: i32) -> (i32, i32) {
    %c0_i32 = arith.constant 0 : i32
    %c0_i32_0 = arith.constant 0 : i32
    return %c0_i32, %arg0 : i32, i32
  }
  func.func @transform_1(%arg0: i32) -> (i32, i32) {
    %c0_i32 = arith.constant 0 : i32
    %c0_i32_0 = arith.constant 0 : i32
    return %c0_i32, %arg0 : i32, i32
  }
}

</mosaic_0001>

<llo_original>
// kernel: tpu_custom_call.1
$region0: #{tpu_custom_call.1}
  #allocation0 [shape = 'u32[]', space=smem, size = 0x4, offset = 0x4, fixed_abs, tag = 'smem constant byte address 0x4 - core index']
  #allocation1 [shape = 'u32[144,128]{1,0:T(1,128)}', space=vmem, size = 0x12000, scoped, tag = 'internal scratch']
  %s0 = inlined_call_operand.hbm [shape: f32[3,256], index: 0, kind: input, shape index: {}]
  %s1 = inlined_call_operand.hbm [shape: f32[63,256], index: 1, kind: output, shape index: {}]
  %s2 = sld [smem:[#allocation0]]
  $region41: #{tpu_custom_call.1} parent=0
    _
  %s4 = ssub.s32 1, %s2
  %s5 = scalar_select 0, %s4, %s2
  $region1: #{tpu_custom_call.1} parent=0
    #allocation2 [shape = 'u8[4096]{0}', space=vmem, size = 0x1000, scoped, tag = 'input window, operand 0']
    #allocation3 [shape = 's32[2]{0}', space=sflag, size = 0x8, scoped, tag = 'scoped memory for tpu_custom_call.1']
    #allocation4 [shape = 's32[2]{0}', space=sflag, size = 0x8, scoped, tag = 'scoped memory for tpu_custom_call.1']
    #allocation5 [shape = 'u8[65536]{0}', space=vmem, size = 0x10000, scoped, tag = 'output window, operand 0']
    %6 = vsyncpa [#allocation3], 0
    %s7 = scalar_lea.sflag [#allocation3], 1
    %8 = vsyncpa %s7, 0
    %9 = vsyncpa [#allocation4], 0
    %s10 = scalar_lea.sflag [#allocation4], 1
    %11 = vsyncpa %s10, 0
    loop: start=0, step=1, limit=4
    $region2: #{tpu_custom_call.1} parent=1 // loop_pre_header
      _
    $region3: #{tpu_custom_call.1} parent=1 // loop_header
      %s13 = sphi 0, %s17
      %p14 = scmp.ge.s32.totalorder %s13, 4
      %s23 = sphi 0, %s25
      %s26 = sphi 0, %s23
      %s27 = sphi 0, %s26
      %s43 = sphi 0, %s27
      %s49 = sphi 0, %s51
      %s52 = sphi 0, %s49
      %s53 = sphi 0, %s52
      %s69 = sphi 0, %s53
    $region4: #{tpu_custom_call.1} parent=1 // loop_header_branch
      %16 = sbr.rel (%p14) target = $region8
    $region5: #{tpu_custom_call.1} parent=1 // loop_body
      %s18 = ssub.s32 %s13, 1
      %s19 = ssub.s32 %s13, 2
      %s20 = sadd.s32 %s13, 1
      %s21 = ssub.s32 %s13, %s20
      %p22 = scmp.eq.s32.totalorder %s21, 0
      %s24 = sadd.s32 %s23, 1
      %s25 = scalar_select %p22, %s23, %s24
      %p28 = pneg %p22
      %p29 = scmp.eq.s32.totalorder %s13, 1
      %p30 = por %p28, %p29
      %p31 = scmp.ne.s32.totalorder %s23, %s26
      %p32 = scmp.eq.s32.totalorder %s13, 0
      %p33 = por %p31, %p32
      %p34 = scmp.ne.s32.totalorder %s23, %s26
      %p35 = scmp.eq.s32.totalorder %s18, 1
      %p36 = por %p34, %p35
      %p37 = scmp.ne.s32.totalorder %s26, %s27
      %p38 = scmp.eq.s32.totalorder %s18, 0
      %p39 = por %p37, %p38
      %p40 = scmp.ne.s32.totalorder %s26, %s27
      %p41 = scmp.eq.s32.totalorder %s19, 1
      %p42 = por %p40, %p41
      %p44 = scmp.ne.s32.totalorder %s27, %s43
      %p45 = scmp.eq.s32.totalorder %s19, 0
      %p46 = por %p44, %p45
      %s47 = ssub.s32 %s13, %s20
      %p48 = scmp.eq.s32.totalorder %s47, 0
      %s50 = sadd.s32 %s49, 1
      %s51 = scalar_select %p48, %s49, %s50
      %p54 = pneg %p48
      %p55 = scmp.eq.s32.totalorder %s13, 1
      %p56 = por %p54, %p55
      %p57 = scmp.ne.s32.totalorder %s49, %s52
      %p58 = scmp.eq.s32.totalorder %s13, 0
      %p59 = por %p57, %p58
      %p60 = scmp.ne.s32.totalorder %s49, %s52
      %p61 = scmp.eq.s32.totalorder %s18, 1
      %p62 = por %p60, %p61
      %p63 = scmp.ne.s32.totalorder %s52, %s53
      %p64 = scmp.eq.s32.totalorder %s18, 0
      %p65 = por %p63, %p64
      %p66 = scmp.ne.s32.totalorder %s52, %s53
      %p67 = scmp.eq.s32.totalorder %s19, 1
      %p68 = por %p66, %p67
      %p70 = scmp.ne.s32.totalorder %s53, %s69
      %p71 = scmp.eq.s32.totalorder %s19, 0
      %p72 = por %p70, %p71
      %p73 = scmp.le.s32.totalorder 1, %s13
      %p74 = scmp.lt.s32.totalorder %s13, 3
      %p75 = pnand %p73, %p74
      %p76 = pneg %p75
      // Predicated region
      $region9: #{tpu_custom_call.1} parent=5 // pred_check
        _
      $region10: #{tpu_custom_call.1} parent=5 // pred_check_branch
        %78 = sbr.rel (%p75) target = $region12
      $region11: #{tpu_custom_call.1} parent=5 // pred_region
        %s79 = ssub.s32 %s13, 1
      $region12: #{tpu_custom_call.1} parent=5 // pred_fallthru
        _
      %p80 = scmp.lt.s32.totalorder %s13, 2
      // Predicated region
      $region13: #{tpu_custom_call.1} parent=5 // pred_check
        %p81 = pneg %p80
      $region14: #{tpu_custom_call.1} parent=5 // pred_check_branch
        %83 = sbr.rel (%p81) target = $region16
      $region15: #{tpu_custom_call.1} parent=5 // pred_region
        // Predicated region
        $region17: #{tpu_custom_call.1} parent=15 // pred_check
          %p84 = pneg %p33
        $region18: #{tpu_custom_call.1} parent=15 // pred_check_branch
          %86 = sbr.rel (%p84) target = $region20
        $region19: #{tpu_custom_call.1} parent=15 // pred_region
          %s87 = sand.u32 %s23, 1
          %s88 = scalar_lea.sflag [#allocation3], %s87
          %s89 = sand.u32 %s23, 1
          %s90 = smul.addr %s89, 4
          %s91 = scalar_lea.vmem [#allocation2], %s90
          %s93 = ssub.s32 64, 64
          %94 = vsyncadd %s88, %s93
          %s95 = smul.addr %s13, 64
          %s96 = scalar_lea.hbm %s0, %s95
          %s98 = sshll.u32 %s91, 4
          %s99 = int_to_ptr.vmem [resolvable:$true] %s98
          %101 = dma.hbm_to_vmem [thread:$0]  %s96, 64, %s99, %s88
        $region20: #{tpu_custom_call.1} parent=15 // pred_fallthru
          _
      $region16: #{tpu_custom_call.1} parent=5 // pred_fallthru
        _
      %p102 = scmp.le.s32.totalorder 1, %s13
      %p103 = scmp.lt.s32.totalorder %s13, 3
      %p104 = pnand %p102, %p103
      %p105 = pneg %p104
      // Predicated region
      $region21: #{tpu_custom_call.1} parent=5 // pred_check
        _
      $region22: #{tpu_custom_call.1} parent=5 // pred_check_branch
        %107 = sbr.rel (%p104) target = $region24
      $region23: #{tpu_custom_call.1} parent=5 // pred_region
        %s108 = ssub.s32 %s13, 1
        %s109 = sand.u32 %s26, 1
        %s110 = scalar_lea.sflag [#allocation3], %s109
        %s111 = sand.u32 %s26, 1
        %s112 = smul.addr %s111, 4
        %s113 = scalar_lea.vmem [#allocation2], %s112
        // Predicated region
        $region25: #{tpu_custom_call.1} parent=23 // pred_check
          %p114 = pneg %p39
        $region26: #{tpu_custom_call.1} parent=23 // pred_check_branch
          %116 = sbr.rel (%p114) target = $region28
        $region27: #{tpu_custom_call.1} parent=23 // pred_region
          %117 = dma.done %s110, 64
        $region28: #{tpu_custom_call.1} parent=23 // pred_fallthru
          _
        %s118 = sand.u32 %s26, 1
        %s119 = scalar_lea.sflag [#allocation3], %s118
        %s120 = sand.u32 %s26, 1
        %s121 = smul.addr %s120, 4
        %s122 = scalar_lea.vmem [#allocation2], %s121
        %p123 = pneg %p39
        %p124 = pneg %p36
        %p125 = pneg %p65
        %p126 = pneg %p62
        %s127 = sand.u32 %s52, 1
        %s128 = scalar_lea.sflag [#allocation4], %s127
        %s129 = sand.u32 %s52, 1
        %s130 = smul.addr %s129, 64
        %s131 = scalar_lea.vmem [#allocation5], %s130
        %v132 = vld [vmem:[%s113] sm:$0x7]
        %133 = vst [vmem:[%s131] sm:$0x7] %v132
        %v134 = vand.u32 2147483647, %v132
        %vm135 = vcmp.le.f32.partialorder %v134, 0.7853982
        %vm136 = vcmp.lt.s32.totalorder %v132, 0
        %v137 = vand.u32 %v132, 2139095040
        %v138 = vshrl.u32 %v137, 23
        %v139 = vsub.s32 %v138, 127
        %v140 = vand.u32 2147483647, %v132
        %v141 = vand.u32 %v140, 8388607
        %v142 = vor.u32 %v141, 8388608
        %v143 = vsub.s32 0, %v142
        %v144 = vadd.s32 %v139, 1
        %vm145 = vcmp.gt.s32.totalorder %v144, 0
        %v146 = vsel %vm145, %v144, 0
        %v147 = vshrl.u32 %v146, 5
        %v148 = vand.u32 %v146, 31
        %v149 = vsub.s32 32, %v148
        %v150 = vshrl.u32 683565275, %v149
        %v151 = vshll.u32 683565275, %v148
        %v152 = vshrl.u32 2475754826, %v149
        %v153 = vor.u32 %v151, %v152
        %v154 = vshll.u32 2475754826, %v148
        %v155 = vshrl.u32 2131351028, %v149
        %v156 = vor.u32 %v154, %v155
        %v157 = vshll.u32 2131351028, %v148
        %v158 = vshrl.u32 2102212464, %v149
        %v159 = vor.u32 %v157, %v158
        %v160 = vshll.u32 2102212464, %v148
        %v161 = vshrl.u32 920167782, %v149
        %v162 = vor.u32 %v160, %v161
        %v163 = vshll.u32 920167782, %v148
        %v164 = vshrl.u32 1326507024, %v149
        %v165 = vor.u32 %v163, %v164
        %vm166 = vcmp.lt.s32.totalorder %v147, 1
        %vm167 = vcmp.lt.s32.totalorder %v147, 2
        %vm168 = vcmp.lt.s32.totalorder %v147, 3
        %vm169 = vcmp.lt.s32.totalorder %v147, 4
        %v170 = vsel %vm166, %v150, %v153
        %v171 = vsel %vm169, %v159, 2102212464
        %v172 = vsel %vm168, %v156, %v171
        %v173 = vsel %vm167, %v170, %v172
        %v174 = vsel %vm166, %v153, %v156
        %v175 = vsel %vm169, %v162, 920167782
        %v176 = vsel %vm168, %v159, %v175
        %v177 = vsel %vm167, %v174, %v176
        %v178 = vsel %vm166, %v156, %v159
        %v179 = vsel %vm169, %v165, 1326507024
        %v180 = vsel %vm168, %v162, %v179
        %v181 = vsel %vm167, %v178, %v180
        %v182 = vshll.u32 %v142, 8
        %v183 = vmul.u32.u64.compose %v182, %v181
        %v184 = vextract.low.u32 %v183
        %v185 = vextract.high.u32 %v183
        %v186 = vmul.u32.u64.compose %v182, %v177
        %v187 = vextract.low.u32 %v186
        %v188 = vextract.high.u32 %v186
        %v189 = vmul.u32 %v182, %v173
        %v190 = vadd.s32 %v185, %v187
        %vm191 = vc.u32 %v185, %v187
        %v192 = vadd.s32 %v188, 1
        %v193 = vsel %vm191, %v192, %v188
        %v194 = vadd.s32 %v189, %v193
        %v195 = vadd.s32 %v194, 536870912
        %v196 = vshrl.u32 %v195, 30
        %v197 = vshll.u32 %v196, 30
        %v198 = vsub.s32 %v194, %v197
        %vm199 = vcmp.lt.s32.totalorder %v198, 0
        %v200 = vsub.s32 0, %v198
        %v201 = vsel %vm199, %v200, %v198
        %v202 = vclz %v201
        %v203 = vsub.s32 %v202, 2
        %vm204 = vcmp.gt.s32.totalorder 0, %v203
        %v205 = vsel %vm204, 0, %v203
        %v206 = vsub.s32 32, %v205
        %v207 = vshll.u32 %v198, %v205
        %v208 = vshrl.u32 %v190, %v206
        %v209 = vor.u32 %v207, %v208
        %v210 = vsub.s32 4294967266, %v205
        %v211 = vadd.s32 %v210, 127
        %v212 = vshll.u32 %v211, 23
        %v213 = vor.u32 4788187, %v212
        %v214 = vand.u32 2147483647, %v213
        %v216 = vcvt.s32.f32 %v209
        %v217 = vmul.f32 %v216, %v214
        %v218 = vxor.u32 %v217, 2147483648
        %v219 = vsel %vm136, %v218, %v217
        %v220 = vsub.s32 4, %v196
        %v221 = vsel %vm136, %v220, %v196
        %v222 = vsel %vm135, %v132, %v219
        %v223 = vsel %vm135, 0, %v221
        %v224 = vcosq.f32.pop %v222
        %v225 = vsinq.f32.pop %v222
        %vm226 = vweird.f32 %v132
        %v227 = vadd.s32 %v223, 3
        %v228 = vand.u32 %v227, 3
        %vm229 = vcmp.lt.s32.totalorder %v228, 2
        %vm230 = vcmp.eq.s32.totalorder %v228, 0
        %v231 = vxor.u32 %v225, 2147483648
        %v232 = vsel %vm230, %v224, %v231
        %vm233 = vcmp.eq.s32.totalorder %v228, 2
        %v234 = vxor.u32 %v224, 2147483648
        %v235 = vsel %vm233, %v234, %v225
        %v236 = vsel %vm229, %v232, %v235
        %v237 = vsel %vm226, nan, %v236
        %238 = vst [vmem:[%s131 + $0x3] sm:$0x7] %v237
        %v239 = vand.u32 2147483647, %v132
        %vm240 = vcmp.le.f32.partialorder %v239, 0.7853982
        %vm241 = vcmp.lt.s32.totalorder %v132, 0
        %v242 = vand.u32 %v132, 2139095040
        %v243 = vshrl.u32 %v242, 23
        %v244 = vsub.s32 %v243, 127
        %v245 = vand.u32 2147483647, %v132
        %v246 = vand.u32 %v245, 8388607
        %v247 = vor.u32 %v246, 8388608
        %v248 = vsub.s32 0, %v247
        %v249 = vadd.s32 %v244, 1
        %vm250 = vcmp.gt.s32.totalorder %v249, 0
        %v251 = vsel %vm250, %v249, 0
        %v252 = vshrl.u32 %v251, 5
        %v253 = vand.u32 %v251, 31
        %v254 = vsub.s32 32, %v253
        %v255 = vshrl.u32 683565275, %v254
        %v256 = vshll.u32 683565275, %v253
        %v257 = vshrl.u32 2475754826, %v254
        %v258 = vor.u32 %v256, %v257
        %v259 = vshll.u32 2475754826, %v253
        %v260 = vshrl.u32 2131351028, %v254
        %v261 = vor.u32 %v259, %v260
        %v262 = vshll.u32 2131351028, %v253
        %v263 = vshrl.u32 2102212464, %v254
        %v264 = vor.u32 %v262, %v263
        %v265 = vshll.u32 2102212464, %v253
        %v266 = vshrl.u32 920167782, %v254
        %v267 = vor.u32 %v265, %v266
        %v268 = vshll.u32 920167782, %v253
        %v269 = vshrl.u32 1326507024, %v254
        %v270 = vor.u32 %v268, %v269
        %vm271 = vcmp.lt.s32.totalorder %v252, 1
        %vm272 = vcmp.lt.s32.totalorder %v252, 2
        %vm273 = vcmp.lt.s32.totalorder %v252, 3
        %vm274 = vcmp.lt.s32.totalorder %v252, 4
        %v275 = vsel %vm271, %v255, %v258
        %v276 = vsel %vm274, %v264, 2102212464
        %v277 = vsel %vm273, %v261, %v276
        %v278 = vsel %vm272, %v275, %v277
        %v279 = vsel %vm271, %v258, %v261
        %v280 = vsel %vm274, %v267, 920167782
        %v281 = vsel %vm273, %v264, %v280
        %v282 = vsel %vm272, %v279, %v281
        %v283 = vsel %vm271, %v261, %v264
        %v284 = vsel %vm274, %v270, 1326507024
        %v285 = vsel %vm273, %v267, %v284
        %v286 = vsel %vm272, %v283, %v285
        %v287 = vshll.u32 %v247, 8
        %v288 = vmul.u32.u64.compose %v287, %v286
        %v289 = vextract.low.u32 %v288
        %v290 = vextract.high.u32 %v288
        %v291 = vmul.u32.u64.compose %v287, %v282
        %v292 = vextract.low.u32 %v291
        %v293 = vextract.high.u32 %v291
        %v294 = vmul.u32 %v287, %v278
        %v295 = vadd.s32 %v290, %v292
        %vm296 = vc.u32 %v290, %v292
        %v297 = vadd.s32 %v293, 1
        %v298 = vsel %vm296, %v297, %v293
        %v299 = vadd.s32 %v294, %v298
        %v300 = vadd.s32 %v299, 536870912
        %v301 = vshrl.u32 %v300, 30
        %v302 = vshll.u32 %v301, 30
        %v303 = vsub.s32 %v299, %v302
        %vm304 = vcmp.lt.s32.totalorder %v303, 0
        %v305 = vsub.s32 0, %v303
        %v306 = vsel %vm304, %v305, %v303
        %v307 = vclz %v306
        %v308 = vsub.s32 %v307, 2
        %vm309 = vcmp.gt.s32.totalorder 0, %v308
        %v310 = vsel %vm309, 0, %v308
        %v311 = vsub.s32 32, %v310
        %v312 = vshll.u32 %v303, %v310
        %v313 = vshrl.u32 %v295, %v311
        %v314 = vor.u32 %v312, %v313
        %v315 = vsub.s32 4294967266, %v310
        %v316 = vadd.s32 %v315, 127
        %v317 = vshll.u32 %v316, 23
        %v318 = vor.u32 4788187, %v317
        %v319 = vand.u32 2147483647, %v318
        %v321 = vcvt.s32.f32 %v314
        %v322 = vmul.f32 %v321, %v319
        %v323 = vxor.u32 %v322, 2147483648
        %v324 = vsel %vm241, %v323, %v322
        %v325 = vsub.s32 4, %v301
        %v326 = vsel %vm241, %v325, %v301
        %v327 = vsel %vm240, %v132, %v324
        %v328 = vsel %vm240, 0, %v326
        %v329 = vcosq.f32.pop %v327
        %v330 = vsinq.f32.pop %v327
        %vm331 = vweird.f32 %v132
        %v332 = vand.u32 %v328, 3
        %vm333 = vcmp.lt.s32.totalorder %v332, 2
        %vm334 = vcmp.eq.s32.totalorder %v332, 0
        %v335 = vxor.u32 %v330, 2147483648
        %v336 = vsel %vm334, %v329, %v335
        %vm337 = vcmp.eq.s32.totalorder %v332, 2
        %v338 = vxor.u32 %v329, 2147483648
        %v339 = vsel %vm337, %v338, %v330
        %v340 = vsel %vm333, %v336, %v339
        %v341 = vsel %vm331, nan, %v340
        %342 = vst [vmem:[%s131 + $0x6] sm:$0x7] %v341
        %v343 = vmul.f32 %v132, 2.0
        %v344 = vand.u32 2147483647, %v343
        %vm345 = vcmp.le.f32.partialorder %v344, 0.7853982
        %vm346 = vcmp.lt.s32.totalorder %v343, 0
        %v347 = vand.u32 %v343, 2139095040
        %v348 = vshrl.u32 %v347, 23
        %v349 = vsub.s32 %v348, 127
        %v350 = vand.u32 2147483647, %v343
        %v351 = vand.u32 %v350, 8388607
        %v352 = vor.u32 %v351, 8388608
        %v353 = vsub.s32 0, %v352
        %v354 = vadd.s32 %v349, 1
        %vm355 = vcmp.gt.s32.totalorder %v354, 0
        %v356 = vsel %vm355, %v354, 0
        %v357 = vshrl.u32 %v356, 5
        %v358 = vand.u32 %v356, 31
        %v359 = vsub.s32 32, %v358
        %v360 = vshrl.u32 683565275, %v359
        %v361 = vshll.u32 683565275, %v358
        %v362 = vshrl.u32 2475754826, %v359
        %v363 = vor.u32 %v361, %v362
        %v364 = vshll.u32 2475754826, %v358
        %v365 = vshrl.u32 2131351028, %v359
        %v366 = vor.u32 %v364, %v365
        %v367 = vshll.u32 2131351028, %v358
        %v368 = vshrl.u32 2102212464, %v359
        %v369 = vor.u32 %v367, %v368
        %v370 = vshll.u32 2102212464, %v358
        %v371 = vshrl.u32 920167782, %v359
        %v372 = vor.u32 %v370, %v371
        %v373 = vshll.u32 920167782, %v358
        %v374 = vshrl.u32 1326507024, %v359
        %v375 = vor.u32 %v373, %v374
        %vm376 = vcmp.lt.s32.totalorder %v357, 1
        %vm377 = vcmp.lt.s32.totalorder %v357, 2
        %vm378 = vcmp.lt.s32.totalorder %v357, 3
        %vm379 = vcmp.lt.s32.totalorder %v357, 4
        %v380 = vsel %vm376, %v360, %v363
        %v381 = vsel %vm379, %v369, 2102212464
        %v382 = vsel %vm378, %v366, %v381
        %v383 = vsel %vm377, %v380, %v382
        %v384 = vsel %vm376, %v363, %v366
        %v385 = vsel %vm379, %v372, 920167782
        %v386 = vsel %vm378, %v369, %v385
        %v387 = vsel %vm377, %v384, %v386
        %v388 = vsel %vm376, %v366, %v369
        %v389 = vsel %vm379, %v375, 1326507024
        %v390 = vsel %vm378, %v372, %v389
        %v391 = vsel %vm377, %v388, %v390
        %v392 = vshll.u32 %v352, 8
        %v393 = vmul.u32.u64.compose %v392, %v391
        %v394 = vextract.low.u32 %v393
        %v395 = vextract.high.u32 %v393
        %v396 = vmul.u32.u64.compose %v392, %v387
        %v397 = vextract.low.u32 %v396
        %v398 = vextract.high.u32 %v396
        %v399 = vmul.u32 %v392, %v383
        %v400 = vadd.s32 %v395, %v397
        %vm401 = vc.u32 %v395, %v397
        %v402 = vadd.s32 %v398, 1
        %v403 = vsel %vm401, %v402, %v398
        %v404 = vadd.s32 %v399, %v403
        %v405 = vadd.s32 %v404, 536870912
        %v406 = vshrl.u32 %v405, 30
        %v407 = vshll.u32 %v406, 30
        %v408 = vsub.s32 %v404, %v407
        %vm409 = vcmp.lt.s32.totalorder %v408, 0
        %v410 = vsub.s32 0, %v408
        %v411 = vsel %vm409, %v410, %v408
        %v412 = vclz %v411
        %v413 = vsub.s32 %v412, 2
        %vm414 = vcmp.gt.s32.totalorder 0, %v413
        %v415 = vsel %vm414, 0, %v413
        %v416 = vsub.s32 32, %v415
        %v417 = vshll.u32 %v408, %v415
        %v418 = vshrl.u32 %v400, %v416
        %v419 = vor.u32 %v417, %v418
        %v420 = vsub.s32 4294967266, %v415
        %v421 = vadd.s32 %v420, 127
        %v422 = vshll.u32 %v421, 23
        %v423 = vor.u32 4788187, %v422
        %v424 = vand.u32 2147483647, %v423
        %v426 = vcvt.s32.f32 %v419
        %v427 = vmul.f32 %v426, %v424
        %v428 = vxor.u32 %v427, 2147483648
        %v429 = vsel %vm346, %v428, %v427
        %v430 = vsub.s32 4, %v406
        %v431 = vsel %vm346, %v430, %v406
        %v432 = vsel %vm345, %v343, %v429
        %v433 = vsel %vm345, 0, %v431
        %v434 = vcosq.f32.pop %v432
        %v435 = vsinq.f32.pop %v432
        %vm436 = vweird.f32 %v343
        %v437 = vadd.s32 %v433, 3
        %v438 = vand.u32 %v437, 3
        %vm439 = vcmp.lt.s32.totalorder %v438, 2
        %vm440 = vcmp.eq.s32.totalorder %v438, 0
        %v441 = vxor.u32 %v435, 2147483648
        %v442 = vsel %vm440, %v434, %v441
        %vm443 = vcmp.eq.s32.totalorder %v438, 2
        %v444 = vxor.u32 %v434, 2147483648
        %v445 = vsel %vm443, %v444, %v435
        %v446 = vsel %vm439, %v442, %v445
        %v447 = vsel %vm436, nan, %v446
        %448 = vst [vmem:[%s131 + $0x9] sm:$0x7] %v447
        %v449 = vand.u32 2147483647, %v343
        %vm450 = vcmp.le.f32.partialorder %v449, 0.7853982
        %vm451 = vcmp.lt.s32.totalorder %v343, 0
        %v452 = vand.u32 %v343, 2139095040
        %v453 = vshrl.u32 %v452, 23
        %v454 = vsub.s32 %v453, 127
        %v455 = vand.u32 2147483647, %v343
        %v456 = vand.u32 %v455, 8388607
        %v457 = vor.u32 %v456, 8388608
        %v458 = vsub.s32 0, %v457
        %v459 = vadd.s32 %v454, 1
        %vm460 = vcmp.gt.s32.totalorder %v459, 0
        %v461 = vsel %vm460, %v459, 0
        %v462 = vshrl.u32 %v461, 5
        %v463 = vand.u32 %v461, 31
        %v464 = vsub.s32 32, %v463
        %v465 = vshrl.u32 683565275, %v464
        %v466 = vshll.u32 683565275, %v463
        %v467 = vshrl.u32 2475754826, %v464
        %v468 = vor.u32 %v466, %v467
        %v469 = vshll.u32 2475754826, %v463
        %v470 = vshrl.u32 2131351028, %v464
        %v471 = vor.u32 %v469, %v470
        %v472 = vshll.u32 2131351028, %v463
        %v473 = vshrl.u32 2102212464, %v464
        %v474 = vor.u32 %v472, %v473
        %v475 = vshll.u32 2102212464, %v463
        %v476 = vshrl.u32 920167782, %v464
        %v477 = vor.u32 %v475, %v476
        %v478 = vshll.u32 920167782, %v463
        %v479 = vshrl.u32 1326507024, %v464
        %v480 = vor.u32 %v478, %v479
        %vm481 = vcmp.lt.s32.totalorder %v462, 1
        %vm482 = vcmp.lt.s32.totalorder %v462, 2
        %vm483 = vcmp.lt.s32.totalorder %v462, 3
        %vm484 = vcmp.lt.s32.totalorder %v462, 4
        %v485 = vsel %vm481, %v465, %v468
        %v486 = vsel %vm484, %v474, 2102212464
        %v487 = vsel %vm483, %v471, %v486
        %v488 = vsel %vm482, %v485, %v487
        %v489 = vsel %vm481, %v468, %v471
        %v490 = vsel %vm484, %v477, 920167782
        %v491 = vsel %vm483, %v474, %v490
        %v492 = vsel %vm482, %v489, %v491
        %v493 = vsel %vm481, %v471, %v474
        %v494 = vsel %vm484, %v480, 1326507024
        %v495 = vsel %vm483, %v477, %v494
        %v496 = vsel %vm482, %v493, %v495
        %v497 = vshll.u32 %v457, 8
        %v498 = vmul.u32.u64.compose %v497, %v496
        %v499 = vextract.low.u32 %v498
        %v500 = vextract.high.u32 %v498
        %v501 = vmul.u32.u64.compose %v497, %v492
        %v502 = vextract.low.u32 %v501
        %v503 = vextract.high.u32 %v501
        %v504 = vmul.u32 %v497, %v488
        %v505 = vadd.s32 %v500, %v502
        %vm506 = vc.u32 %v500, %v502
        %v507 = vadd.s32 %v503, 1
        %v508 = vsel %vm506, %v507, %v503
        %v509 = vadd.s32 %v504, %v508
        %v510 = vadd.s32 %v509, 536870912
        %v511 = vshrl.u32 %v510, 30
        %v512 = vshll.u32 %v511, 30
        %v513 = vsub.s32 %v509, %v512
        %vm514 = vcmp.lt.s32.totalorder %v513, 0
        %v515 = vsub.s32 0, %v513
        %v516 = vsel %vm514, %v515, %v513
        %v517 = vclz %v516
        %v518 = vsub.s32 %v517, 2
        %vm519 = vcmp.gt.s32.totalorder 0, %v518
        %v520 = vsel %vm519, 0, %v518
        %v521 = vsub.s32 32, %v520
        %v522 = vshll.u32 %v513, %v520
        %v523 = vshrl.u32 %v505, %v521
        %v524 = vor.u32 %v522, %v523
        %v525 = vsub.s32 4294967266, %v520
        %v526 = vadd.s32 %v525, 127
        %v527 = vshll.u32 %v526, 23
        %v528 = vor.u32 4788187, %v527
        %v529 = vand.u32 2147483647, %v528
        %v531 = vcvt.s32.f32 %v524
        %v532 = vmul.f32 %v531, %v529
        %v533 = vxor.u32 %v532, 2147483648
        %v534 = vsel %vm451, %v533, %v532
        %v535 = vsub.s32 4, %v511
        %v536 = vsel %vm451, %v535, %v511
        %v537 = vsel %vm450, %v343, %v534
        %v538 = vsel %vm450, 0, %v536
        %v539 = vcosq.f32.pop %v537
        %v540 = vsinq.f32.pop %v537
        %vm541 = vweird.f32 %v343
        %v542 = vand.u32 %v538, 3
        %vm543 = vcmp.lt.s32.totalorder %v542, 2
        %vm544 = vcmp.eq.s32.totalorder %v542, 0
        %v545 = vxor.u32 %v540, 2147483648
        %v546 = vsel %vm544, %v539, %v545
        %vm547 = vcmp.eq.s32.totalorder %v542, 2
        %v548 = vxor.u32 %v539, 2147483648
        %v549 = vsel %vm547, %v548, %v540
        %v550 = vsel %vm543, %v546, %v549
        %v551 = vsel %vm541, nan, %v550
        %552 = vst [vmem:[%s131 + $0xc] sm:$0x7] %v551
        %v553 = vmul.f32 %v132, 4.0
        %v554 = vand.u32 2147483647, %v553
        %vm555 = vcmp.le.f32.partialorder %v554, 0.7853982
        %vm556 = vcmp.lt.s32.totalorder %v553, 0
        %v557 = vand.u32 %v553, 2139095040
        %v558 = vshrl.u32 %v557, 23
        %v559 = vsub.s32 %v558, 127
        %v560 = vand.u32 2147483647, %v553
        %v561 = vand.u32 %v560, 8388607
        %v562 = vor.u32 %v561, 8388608
        %v563 = vsub.s32 0, %v562
        %v564 = vadd.s32 %v559, 1
        %vm565 = vcmp.gt.s32.totalorder %v564, 0
        %v566 = vsel %vm565, %v564, 0
        %v567 = vshrl.u32 %v566, 5
        %v568 = vand.u32 %v566, 31
        %v569 = vsub.s32 32, %v568
        %v570 = vshrl.u32 683565275, %v569
        %v571 = vshll.u32 683565275, %v568
        %v572 = vshrl.u32 2475754826, %v569
        %v573 = vor.u32 %v571, %v572
        %v574 = vshll.u32 2475754826, %v568
        %v575 = vshrl.u32 2131351028, %v569
        %v576 = vor.u32 %v574, %v575
        %v577 = vshll.u32 2131351028, %v568
        %v578 = vshrl.u32 2102212464, %v569
        %v579 = vor.u32 %v577, %v578
        %v580 = vshll.u32 2102212464, %v568
        %v581 = vshrl.u32 920167782, %v569
        %v582 = vor.u32 %v580, %v581
        %v583 = vshll.u32 920167782, %v568
        %v584 = vshrl.u32 1326507024, %v569
        %v585 = vor.u32 %v583, %v584
        %vm586 = vcmp.lt.s32.totalorder %v567, 1
        %vm587 = vcmp.lt.s32.totalorder %v567, 2
        %vm588 = vcmp.lt.s32.totalorder %v567, 3
        %vm589 = vcmp.lt.s32.totalorder %v567, 4
        %v590 = vsel %vm586, %v570, %v573
        %v591 = vsel %vm589, %v579, 2102212464
        %v592 = vsel %vm588, %v576, %v591
        %v593 = vsel %vm587, %v590, %v592
        %v594 = vsel %vm586, %v573, %v576
        %v595 = vsel %vm589, %v582, 920167782
        %v596 = vsel %vm588, %v579, %v595
        %v597 = vsel %vm587, %v594, %v596
        %v598 = vsel %vm586, %v576, %v579
        %v599 = vsel %vm589, %v585, 1326507024
        %v600 = vsel %vm588, %v582, %v599
        %v601 = vsel %vm587, %v598, %v600
        %v602 = vshll.u32 %v562, 8
        %v603 = vmul.u32.u64.compose %v602, %v601
        %v604 = vextract.low.u32 %v603
        %v605 = vextract.high.u32 %v603
        %v606 = vmul.u32.u64.compose %v602, %v597
        %v607 = vextract.low.u32 %v606
        %v608 = vextract.high.u32 %v606
        %v609 = vmul.u32 %v602, %v593
        %v610 = vadd.s32 %v605, %v607
        %vm611 = vc.u32 %v605, %v607
        %v612 = vadd.s32 %v608, 1
        %v613 = vsel %vm611, %v612, %v608
        %v614 = vadd.s32 %v609, %v613
        %v615 = vadd.s32 %v614, 536870912
        %v616 = vshrl.u32 %v615, 30
        %v617 = vshll.u32 %v616, 30
        %v618 = vsub.s32 %v614, %v617
        %vm619 = vcmp.lt.s32.totalorder %v618, 0
        %v620 = vsub.s32 0, %v618
        %v621 = vsel %vm619, %v620, %v618
        %v622 = vclz %v621
        %v623 = vsub.s32 %v622, 2
        %vm624 = vcmp.gt.s32.totalorder 0, %v623
        %v625 = vsel %vm624, 0, %v623
        %v626 = vsub.s32 32, %v625
        %v627 = vshll.u32 %v618, %v625
        %v628 = vshrl.u32 %v610, %v626
        %v629 = vor.u32 %v627, %v628
        %v630 = vsub.s32 4294967266, %v625
        %v631 = vadd.s32 %v630, 127
        %v632 = vshll.u32 %v631, 23
        %v633 = vor.u32 4788187, %v632
        %v634 = vand.u32 2147483647, %v633
        %v636 = vcvt.s32.f32 %v629
        %v637 = vmul.f32 %v636, %v634
        %v638 = vxor.u32 %v637, 2147483648
        %v639 = vsel %vm556, %v638, %v637
        %v640 = vsub.s32 4, %v616
        %v641 = vsel %vm556, %v640, %v616
        %v642 = vsel %vm555, %v553, %v639
        %v643 = vsel %vm555, 0, %v641
        %v644 = vcosq.f32.pop %v642
        %v645 = vsinq.f32.pop %v642
        %vm646 = vweird.f32 %v553
        %v647 = vadd.s32 %v643, 3
        %v648 = vand.u32 %v647, 3
        %vm649 = vcmp.lt.s32.totalorder %v648, 2
        %vm650 = vcmp.eq.s32.totalorder %v648, 0
        %v651 = vxor.u32 %v645, 2147483648
        %v652 = vsel %vm650, %v644, %v651
        %vm653 = vcmp.eq.s32.totalorder %v648, 2
        %v654 = vxor.u32 %v644, 2147483648
        %v655 = vsel %vm653, %v654, %v645
        %v656 = vsel %vm649, %v652, %v655
        %v657 = vsel %vm646, nan, %v656
        %658 = vst [vmem:[%s131 + $0xf] sm:$0x7] %v657
        %v659 = vand.u32 2147483647, %v553
        %vm660 = vcmp.le.f32.partialorder %v659, 0.7853982
        %vm661 = vcmp.lt.s32.totalorder %v553, 0
        %v662 = vand.u32 %v553, 2139095040
        %v663 = vshrl.u32 %v662, 23
        %v664 = vsub.s32 %v663, 127
        %v665 = vand.u32 2147483647, %v553
        %v666 = vand.u32 %v665, 8388607
        %v667 = vor.u32 %v666, 8388608
        %v668 = vsub.s32 0, %v667
        %v669 = vadd.s32 %v664, 1
        %vm670 = vcmp.gt.s32.totalorder %v669, 0
        %v671 = vsel %vm670, %v669, 0
        %v672 = vshrl.u32 %v671, 5
        %v673 = vand.u32 %v671, 31
        %v674 = vsub.s32 32, %v673
        %v675 = vshrl.u32 683565275, %v674
        %v676 = vshll.u32 683565275, %v673
        %v677 = vshrl.u32 2475754826, %v674
        %v678 = vor.u32 %v676, %v677
        %v679 = vshll.u32 2475754826, %v673
        %v680 = vshrl.u32 2131351028, %v674
        %v681 = vor.u32 %v679, %v680
        %v682 = vshll.u32 2131351028, %v673
        %v683 = vshrl.u32 2102212464, %v674
        %v684 = vor.u32 %v682, %v683
        %v685 = vshll.u32 2102212464, %v673
        %v686 = vshrl.u32 920167782, %v674
        %v687 = vor.u32 %v685, %v686
        %v688 = vshll.u32 920167782, %v673
        %v689 = vshrl.u32 1326507024, %v674
        %v690 = vor.u32 %v688, %v689
        %vm691 = vcmp.lt.s32.totalorder %v672, 1
        %vm692 = vcmp.lt.s32.totalorder %v672, 2
        %vm693 = vcmp.lt.s32.totalorder %v672, 3
        %vm694 = vcmp.lt.s32.totalorder %v672, 4
        %v695 = vsel %vm691, %v675, %v678
        %v696 = vsel %vm694, %v684, 2102212464
        %v697 = vsel %vm693, %v681, %v696
        %v698 = vsel %vm692, %v695, %v697
        %v699 = vsel %vm691, %v678, %v681
        %v700 = vsel %vm694, %v687, 920167782
        %v701 = vsel %vm693, %v684, %v700
        %v702 = vsel %vm692, %v699, %v701
        %v703 = vsel %vm691, %v681, %v684
        %v704 = vsel %vm694, %v690, 1326507024
        %v705 = vsel %vm693, %v687, %v704
        %v706 = vsel %vm692, %v703, %v705
        %v707 = vshll.u32 %v667, 8
        %v708 = vmul.u32.u64.compose %v707, %v706
        %v709 = vextract.low.u32 %v708
        %v710 = vextract.high.u32 %v708
        %v711 = vmul.u32.u64.compose %v707, %v702
        %v712 = vextract.low.u32 %v711
        %v713 = vextract.high.u32 %v711
        %v714 = vmul.u32 %v707, %v698
        %v715 = vadd.s32 %v710, %v712
        %vm716 = vc.u32 %v710, %v712
        %v717 = vadd.s32 %v713, 1
        %v718 = vsel %vm716, %v717, %v713
        %v719 = vadd.s32 %v714, %v718
        %v720 = vadd.s32 %v719, 536870912
        %v721 = vshrl.u32 %v720, 30
        %v722 = vshll.u32 %v721, 30
        %v723 = vsub.s32 %v719, %v722
        %vm724 = vcmp.lt.s32.totalorder %v723, 0
        %v725 = vsub.s32 0, %v723
        %v726 = vsel %vm724, %v725, %v723
        %v727 = vclz %v726
        %v728 = vsub.s32 %v727, 2
        %vm729 = vcmp.gt.s32.totalorder 0, %v728
        %v730 = vsel %vm729, 0, %v728
        %v731 = vsub.s32 32, %v730
        %v732 = vshll.u32 %v723, %v730
        %v733 = vshrl.u32 %v715, %v731
        %v734 = vor.u32 %v732, %v733
        %v735 = vsub.s32 4294967266, %v730
        %v736 = vadd.s32 %v735, 127
        %v737 = vshll.u32 %v736, 23
        %v738 = vor.u32 4788187, %v737
        %v739 = vand.u32 2147483647, %v738
        %v741 = vcvt.s32.f32 %v734
        %v742 = vmul.f32 %v741, %v739
        %v743 = vxor.u32 %v742, 2147483648
        %v744 = vsel %vm661, %v743, %v742
        %v745 = vsub.s32 4, %v721
        %v746 = vsel %vm661, %v745, %v721
        %v747 = vsel %vm660, %v553, %v744
        %v748 = vsel %vm660, 0, %v746
        %v749 = vcosq.f32.pop %v747
        %v750 = vsinq.f32.pop %v747
        %vm751 = vweird.f32 %v553
        %v752 = vand.u32 %v748, 3
        %vm753 = vcmp.lt.s32.totalorder %v752, 2
        %vm754 = vcmp.eq.s32.totalorder %v752, 0
        %v755 = vxor.u32 %v750, 2147483648
        %v756 = vsel %vm754, %v749, %v755
        %vm757 = vcmp.eq.s32.totalorder %v752, 2
        %v758 = vxor.u32 %v749, 2147483648
        %v759 = vsel %vm757, %v758, %v750
        %v760 = vsel %vm753, %v756, %v759
        %v761 = vsel %vm751, nan, %v760
        %762 = vst [vmem:[%s131 + $0x12] sm:$0x7] %v761
        %v763 = vmul.f32 %v132, 8.0
        %v764 = vand.u32 2147483647, %v763
        %vm765 = vcmp.le.f32.partialorder %v764, 0.7853982
        %vm766 = vcmp.lt.s32.totalorder %v763, 0
        %v767 = vand.u32 %v763, 2139095040
        %v768 = vshrl.u32 %v767, 23
        %v769 = vsub.s32 %v768, 127
        %v770 = vand.u32 2147483647, %v763
        %v771 = vand.u32 %v770, 8388607
        %v772 = vor.u32 %v771, 8388608
        %v773 = vsub.s32 0, %v772
        %v774 = vadd.s32 %v769, 1
        %vm775 = vcmp.gt.s32.totalorder %v774, 0
        %v776 = vsel %vm775, %v774, 0
        %v777 = vshrl.u32 %v776, 5
        %v778 = vand.u32 %v776, 31
        %v779 = vsub.s32 32, %v778
        %v780 = vshrl.u32 683565275, %v779
        %v781 = vshll.u32 683565275, %v778
        %v782 = vshrl.u32 2475754826, %v779
        %v783 = vor.u32 %v781, %v782
        %v784 = vshll.u32 2475754826, %v778
        %v785 = vshrl.u32 2131351028, %v779
        %v786 = vor.u32 %v784, %v785
        %v787 = vshll.u32 2131351028, %v778
        %v788 = vshrl.u32 2102212464, %v779
        %v789 = vor.u32 %v787, %v788
        %v790 = vshll.u32 2102212464, %v778
        %v791 = vshrl.u32 920167782, %v779
        %v792 = vor.u32 %v790, %v791
        %v793 = vshll.u32 920167782, %v778
        %v794 = vshrl.u32 1326507024, %v779
        %v795 = vor.u32 %v793, %v794
        %vm796 = vcmp.lt.s32.totalorder %v777, 1
        %vm797 = vcmp.lt.s32.totalorder %v777, 2
        %vm798 = vcmp.lt.s32.totalorder %v777, 3
        %vm799 = vcmp.lt.s32.totalorder %v777, 4
        %v800 = vsel %vm796, %v780, %v783
        %v801 = vsel %vm799, %v789, 2102212464
        %v802 = vsel %vm798, %v786, %v801
        %v803 = vsel %vm797, %v800, %v802
        %v804 = vsel %vm796, %v783, %v786
        %v805 = vsel %vm799, %v792, 920167782
        %v806 = vsel %vm798, %v789, %v805
        %v807 = vsel %vm797, %v804, %v806
        %v808 = vsel %vm796, %v786, %v789
        %v809 = vsel %vm799, %v795, 1326507024
        %v810 = vsel %vm798, %v792, %v809
        %v811 = vsel %vm797, %v808, %v810
        %v812 = vshll.u32 %v772, 8
        %v813 = vmul.u32.u64.compose %v812, %v811
        %v814 = vextract.low.u32 %v813
        %v815 = vextract.high.u32 %v813
        %v816 = vmul.u32.u64.compose %v812, %v807
        %v817 = vextract.low.u32 %v816
        %v818 = vextract.high.u32 %v816
        %v819 = vmul.u32 %v812, %v803
        %v820 = vadd.s32 %v815, %v817
        %vm821 = vc.u32 %v815, %v817
        %v822 = vadd.s32 %v818, 1
        %v823 = vsel %vm821, %v822, %v818
        %v824 = vadd.s32 %v819, %v823
        %v825 = vadd.s32 %v824, 536870912
        %v826 = vshrl.u32 %v825, 30
        %v827 = vshll.u32 %v826, 30
        %v828 = vsub.s32 %v824, %v827
        %vm829 = vcmp.lt.s32.totalorder %v828, 0
        %v830 = vsub.s32 0, %v828
        %v831 = vsel %vm829, %v830, %v828
        %v832 = vclz %v831
        %v833 = vsub.s32 %v832, 2
        %vm834 = vcmp.gt.s32.totalorder 0, %v833
        %v835 = vsel %vm834, 0, %v833
        %v836 = vsub.s32 32, %v835
        %v837 = vshll.u32 %v828, %v835
        %v838 = vshrl.u32 %v820, %v836
        %v839 = vor.u32 %v837, %v838
        %v840 = vsub.s32 4294967266, %v835
        %v841 = vadd.s32 %v840, 127
        %v842 = vshll.u32 %v841, 23
        %v843 = vor.u32 4788187, %v842
        %v844 = vand.u32 2147483647, %v843
        %v846 = vcvt.s32.f32 %v839
        %v847 = vmul.f32 %v846, %v844
        %v848 = vxor.u32 %v847, 2147483648
        %v849 = vsel %vm766, %v848, %v847
        %v850 = vsub.s32 4, %v826
        %v851 = vsel %vm766, %v850, %v826
        %v852 = vsel %vm765, %v763, %v849
        %v853 = vsel %vm765, 0, %v851
        %v854 = vcosq.f32.pop %v852
        %v855 = vsinq.f32.pop %v852
        %vm856 = vweird.f32 %v763
        %v857 = vadd.s32 %v853, 3
        %v858 = vand.u32 %v857, 3
        %vm859 = vcmp.lt.s32.totalorder %v858, 2
        %vm860 = vcmp.eq.s32.totalorder %v858, 0
        %v861 = vxor.u32 %v855, 2147483648
        %v862 = vsel %vm860, %v854, %v861
        %vm863 = vcmp.eq.s32.totalorder %v858, 2
        %v864 = vxor.u32 %v854, 2147483648
        %v865 = vsel %vm863, %v864, %v855
        %v866 = vsel %vm859, %v862, %v865
        %v867 = vsel %vm856, nan, %v866
        %868 = vst [vmem:[%s131 + $0x15] sm:$0x7] %v867
        %v869 = vand.u32 2147483647, %v763
        %vm870 = vcmp.le.f32.partialorder %v869, 0.7853982
        %vm871 = vcmp.lt.s32.totalorder %v763, 0
        %v872 = vand.u32 %v763, 2139095040
        %v873 = vshrl.u32 %v872, 23
        %v874 = vsub.s32 %v873, 127
        %v875 = vand.u32 2147483647, %v763
        %v876 = vand.u32 %v875, 8388607
        %v877 = vor.u32 %v876, 8388608
        %v878 = vsub.s32 0, %v877
        %v879 = vadd.s32 %v874, 1
        %vm880 = vcmp.gt.s32.totalorder %v879, 0
        %v881 = vsel %vm880, %v879, 0
        %v882 = vshrl.u32 %v881, 5
        %v883 = vand.u32 %v881, 31
        %v884 = vsub.s32 32, %v883
        %v885 = vshrl.u32 683565275, %v884
        %v886 = vshll.u32 683565275, %v883
        %v887 = vshrl.u32 2475754826, %v884
        %v888 = vor.u32 %v886, %v887
        %v889 = vshll.u32 2475754826, %v883
        %v890 = vshrl.u32 2131351028, %v884
        %v891 = vor.u32 %v889, %v890
        %v892 = vshll.u32 2131351028, %v883
        %v893 = vshrl.u32 2102212464, %v884
        %v894 = vor.u32 %v892, %v893
        %v895 = vshll.u32 2102212464, %v883
        %v896 = vshrl.u32 920167782, %v884
        %v897 = vor.u32 %v895, %v896
        %v898 = vshll.u32 920167782, %v883
        %v899 = vshrl.u32 1326507024, %v884
        %v900 = vor.u32 %v898, %v899
        %vm901 = vcmp.lt.s32.totalorder %v882, 1
        %vm902 = vcmp.lt.s32.totalorder %v882, 2
        %vm903 = vcmp.lt.s32.totalorder %v882, 3
        %vm904 = vcmp.lt.s32.totalorder %v882, 4
        %v905 = vsel %vm901, %v885, %v888
        %v906 = vsel %vm904, %v894, 2102212464
        %v907 = vsel %vm903, %v891, %v906
        %v908 = vsel %vm902, %v905, %v907
        %v909 = vsel %vm901, %v888, %v891
        %v910 = vsel %vm904, %v897, 920167782
        %v911 = vsel %vm903, %v894, %v910
        %v912 = vsel %vm902, %v909, %v911
        %v913 = vsel %vm901, %v891, %v894
        %v914 = vsel %vm904, %v900, 1326507024
        %v915 = vsel %vm903, %v897, %v914
        %v916 = vsel %vm902, %v913, %v915
        %v917 = vshll.u32 %v877, 8
        %v918 = vmul.u32.u64.compose %v917, %v916
        %v919 = vextract.low.u32 %v918
        %v920 = vextract.high.u32 %v918
        %v921 = vmul.u32.u64.compose %v917, %v912
        %v922 = vextract.low.u32 %v921
        %v923 = vextract.high.u32 %v921
        %v924 = vmul.u32 %v917, %v908
        %v925 = vadd.s32 %v920, %v922
        %vm926 = vc.u32 %v920, %v922
        %v927 = vadd.s32 %v923, 1
        %v928 = vsel %vm926, %v927, %v923
        %v929 = vadd.s32 %v924, %v928
        %v930 = vadd.s32 %v929, 536870912
        %v931 = vshrl.u32 %v930, 30
        %v932 = vshll.u32 %v931, 30
        %v933 = vsub.s32 %v929, %v932
        %vm934 = vcmp.lt.s32.totalorder %v933, 0
        %v935 = vsub.s32 0, %v933
        %v936 = vsel %vm934, %v935, %v933
        %v937 = vclz %v936
        %v938 = vsub.s32 %v937, 2
        %vm939 = vcmp.gt.s32.totalorder 0, %v938
        %v940 = vsel %vm939, 0, %v938
        %v941 = vsub.s32 32, %v940
        %v942 = vshll.u32 %v933, %v940
        %v943 = vshrl.u32 %v925, %v941
        %v944 = vor.u32 %v942, %v943
        %v945 = vsub.s32 4294967266, %v940
        %v946 = vadd.s32 %v945, 127
        %v947 = vshll.u32 %v946, 23
        %v948 = vor.u32 4788187, %v947
        %v949 = vand.u32 2147483647, %v948
        %v951 = vcvt.s32.f32 %v944
        %v952 = vmul.f32 %v951, %v949
        %v953 = vxor.u32 %v952, 2147483648
        %v954 = vsel %vm871, %v953, %v952
        %v955 = vsub.s32 4, %v931
        %v956 = vsel %vm871, %v955, %v931
        %v957 = vsel %vm870, %v763, %v954
        %v958 = vsel %vm870, 0, %v956
        %v959 = vcosq.f32.pop %v957
        %v960 = vsinq.f32.pop %v957
        %vm961 = vweird.f32 %v763
        %v962 = vand.u32 %v958, 3
        %vm963 = vcmp.lt.s32.totalorder %v962, 2
        %vm964 = vcmp.eq.s32.totalorder %v962, 0
        %v965 = vxor.u32 %v960, 2147483648
        %v966 = vsel %vm964, %v959, %v965
        %vm967 = vcmp.eq.s32.totalorder %v962, 2
        %v968 = vxor.u32 %v959, 2147483648
        %v969 = vsel %vm967, %v968, %v960
        %v970 = vsel %vm963, %v966, %v969
        %v971 = vsel %vm961, nan, %v970
        %972 = vst [vmem:[%s131 + $0x18] sm:$0x7] %v971
        %v973 = vmul.f32 %v132, 16.0
        %v974 = vand.u32 2147483647, %v973
        %vm975 = vcmp.le.f32.partialorder %v974, 0.7853982
        %vm976 = vcmp.lt.s32.totalorder %v973, 0
        %v977 = vand.u32 %v973, 2139095040
        %v978 = vshrl.u32 %v977, 23
        %v979 = vsub.s32 %v978, 127
        %v980 = vand.u32 2147483647, %v973
        %v981 = vand.u32 %v980, 8388607
        %v982 = vor.u32 %v981, 8388608
        %v983 = vsub.s32 0, %v982
        %v984 = vadd.s32 %v979, 1
        %vm985 = vcmp.gt.s32.totalorder %v984, 0
        %v986 = vsel %vm985, %v984, 0
        %v987 = vshrl.u32 %v986, 5
        %v988 = vand.u32 %v986, 31
        %v989 = vsub.s32 32, %v988
        %v990 = vshrl.u32 683565275, %v989
        %v991 = vshll.u32 683565275, %v988
        %v992 = vshrl.u32 2475754826, %v989
        %v993 = vor.u32 %v991, %v992
        %v994 = vshll.u32 2475754826, %v988
        %v995 = vshrl.u32 2131351028, %v989
        %v996 = vor.u32 %v994, %v995
        %v997 = vshll.u32 2131351028, %v988
        %v998 = vshrl.u32 2102212464, %v989
        %v999 = vor.u32 %v997, %v998
        %v1000 = vshll.u32 2102212464, %v988
        %v1001 = vshrl.u32 920167782, %v989
        %v1002 = vor.u32 %v1000, %v1001
        %v1003 = vshll.u32 920167782, %v988
        %v1004 = vshrl.u32 1326507024, %v989
        %v1005 = vor.u32 %v1003, %v1004
        %vm1006 = vcmp.lt.s32.totalorder %v987, 1
        %vm1007 = vcmp.lt.s32.totalorder %v987, 2
        %vm1008 = vcmp.lt.s32.totalorder %v987, 3
        %vm1009 = vcmp.lt.s32.totalorder %v987, 4
        %v1010 = vsel %vm1006, %v990, %v993
        %v1011 = vsel %vm1009, %v999, 2102212464
        %v1012 = vsel %vm1008, %v996, %v1011
        %v1013 = vsel %vm1007, %v1010, %v1012
        %v1014 = vsel %vm1006, %v993, %v996
        %v1015 = vsel %vm1009, %v1002, 920167782
        %v1016 = vsel %vm1008, %v999, %v1015
        %v1017 = vsel %vm1007, %v1014, %v1016
        %v1018 = vsel %vm1006, %v996, %v999
        %v1019 = vsel %vm1009, %v1005, 1326507024
        %v1020 = vsel %vm1008, %v1002, %v1019
        %v1021 = vsel %vm1007, %v1018, %v1020
        %v1022 = vshll.u32 %v982, 8
        %v1023 = vmul.u32.u64.compose %v1022, %v1021
        %v1024 = vextract.low.u32 %v1023
        %v1025 = vextract.high.u32 %v1023
        %v1026 = vmul.u32.u64.compose %v1022, %v1017
        %v1027 = vextract.low.u32 %v1026
        %v1028 = vextract.high.u32 %v1026
        %v1029 = vmul.u32 %v1022, %v1013
        %v1030 = vadd.s32 %v1025, %v1027
        %vm1031 = vc.u32 %v1025, %v1027
        %v1032 = vadd.s32 %v1028, 1
        %v1033 = vsel %vm1031, %v1032, %v1028
        %v1034 = vadd.s32 %v1029, %v1033
        %v1035 = vadd.s32 %v1034, 536870912
        %v1036 = vshrl.u32 %v1035, 30
        %v1037 = vshll.u32 %v1036, 30
        %v1038 = vsub.s32 %v1034, %v1037
        %vm1039 = vcmp.lt.s32.totalorder %v1038, 0
        %v1040 = vsub.s32 0, %v1038
        %v1041 = vsel %vm1039, %v1040, %v1038
        %v1042 = vclz %v1041
        %v1043 = vsub.s32 %v1042, 2
        %vm1044 = vcmp.gt.s32.totalorder 0, %v1043
        %v1045 = vsel %vm1044, 0, %v1043
        %v1046 = vsub.s32 32, %v1045
        %v1047 = vshll.u32 %v1038, %v1045
        %v1048 = vshrl.u32 %v1030, %v1046
        %v1049 = vor.u32 %v1047, %v1048
        %v1050 = vsub.s32 4294967266, %v1045
        %v1051 = vadd.s32 %v1050, 127
        %v1052 = vshll.u32 %v1051, 23
        %v1053 = vor.u32 4788187, %v1052
        %v1054 = vand.u32 2147483647, %v1053
        %v1056 = vcvt.s32.f32 %v1049
        %v1057 = vmul.f32 %v1056, %v1054
        %v1058 = vxor.u32 %v1057, 2147483648
        %v1059 = vsel %vm976, %v1058, %v1057
        %v1060 = vsub.s32 4, %v1036
        %v1061 = vsel %vm976, %v1060, %v1036
        %v1062 = vsel %vm975, %v973, %v1059
        %v1063 = vsel %vm975, 0, %v1061
        %v1064 = vcosq.f32.pop %v1062
        %v1065 = vsinq.f32.pop %v1062
        %vm1066 = vweird.f32 %v973
        %v1067 = vadd.s32 %v1063, 3
        %v1068 = vand.u32 %v1067, 3
        %vm1069 = vcmp.lt.s32.totalorder %v1068, 2
        %vm1070 = vcmp.eq.s32.totalorder %v1068, 0
        %v1071 = vxor.u32 %v1065, 2147483648
        %v1072 = vsel %vm1070, %v1064, %v1071
        %vm1073 = vcmp.eq.s32.totalorder %v1068, 2
        %v1074 = vxor.u32 %v1064, 2147483648
        %v1075 = vsel %vm1073, %v1074, %v1065
        %v1076 = vsel %vm1069, %v1072, %v1075
        %v1077 = vsel %vm1066, nan, %v1076
        %1078 = vst [vmem:[%s131 + $0x1b] sm:$0x7] %v1077
        %v1079 = vand.u32 2147483647, %v973
        %vm1080 = vcmp.le.f32.partialorder %v1079, 0.7853982
        %vm1081 = vcmp.lt.s32.totalorder %v973, 0
        %v1082 = vand.u32 %v973, 2139095040
        %v1083 = vshrl.u32 %v1082, 23
        %v1084 = vsub.s32 %v1083, 127
        %v1085 = vand.u32 2147483647, %v973
        %v1086 = vand.u32 %v1085, 8388607
        %v1087 = vor.u32 %v1086, 8388608
        %v1088 = vsub.s32 0, %v1087
        %v1089 = vadd.s32 %v1084, 1
        %vm1090 = vcmp.gt.s32.totalorder %v1089, 0
        %v1091 = vsel %vm1090, %v1089, 0
        %v1092 = vshrl.u32 %v1091, 5
        %v1093 = vand.u32 %v1091, 31
        %v1094 = vsub.s32 32, %v1093
        %v1095 = vshrl.u32 683565275, %v1094
        %v1096 = vshll.u32 683565275, %v1093
        %v1097 = vshrl.u32 2475754826, %v1094
        %v1098 = vor.u32 %v1096, %v1097
        %v1099 = vshll.u32 2475754826, %v1093
        %v1100 = vshrl.u32 2131351028, %v1094
        %v1101 = vor.u32 %v1099, %v1100
        %v1102 = vshll.u32 2131351028, %v1093
        %v1103 = vshrl.u32 2102212464, %v1094
        %v1104 = vor.u32 %v1102, %v1103
        %v1105 = vshll.u32 2102212464, %v1093
        %v1106 = vshrl.u32 920167782, %v1094
        %v1107 = vor.u32 %v1105, %v1106
        %v1108 = vshll.u32 920167782, %v1093
        %v1109 = vshrl.u32 1326507024, %v1094
        %v1110 = vor.u32 %v1108, %v1109
        %vm1111 = vcmp.lt.s32.totalorder %v1092, 1
        %vm1112 = vcmp.lt.s32.totalorder %v1092, 2
        %vm1113 = vcmp.lt.s32.totalorder %v1092, 3
        %vm1114 = vcmp.lt.s32.totalorder %v1092, 4
        %v1115 = vsel %vm1111, %v1095, %v1098
        %v1116 = vsel %vm1114, %v1104, 2102212464
        %v1117 = vsel %vm1113, %v1101, %v1116
        %v1118 = vsel %vm1112, %v1115, %v1117
        %v1119 = vsel %vm1111, %v1098, %v1101
        %v1120 = vsel %vm1114, %v1107, 920167782
        %v1121 = vsel %vm1113, %v1104, %v1120
        %v1122 = vsel %vm1112, %v1119, %v1121
        %v1123 = vsel %vm1111, %v1101, %v1104
        %v1124 = vsel %vm1114, %v1110, 1326507024
        %v1125 = vsel %vm1113, %v1107, %v1124
        %v1126 = vsel %vm1112, %v1123, %v1125
        %v1127 = vshll.u32 %v1087, 8
        %v1128 = vmul.u32.u64.compose %v1127, %v1126
        %v1129 = vextract.low.u32 %v1128
        %v1130 = vextract.high.u32 %v1128
        %v1131 = vmul.u32.u64.compose %v1127, %v1122
        %v1132 = vextract.low.u32 %v1131
        %v1133 = vextract.high.u32 %v1131
        %v1134 = vmul.u32 %v1127, %v1118
        %v1135 = vadd.s32 %v1130, %v1132
        %vm1136 = vc.u32 %v1130, %v1132
        %v1137 = vadd.s32 %v1133, 1
        %v1138 = vsel %vm1136, %v1137, %v1133
        %v1139 = vadd.s32 %v1134, %v1138
        %v1140 = vadd.s32 %v1139, 536870912
        %v1141 = vshrl.u32 %v1140, 30
        %v1142 = vshll.u32 %v1141, 30
        %v1143 = vsub.s32 %v1139, %v1142
        %vm1144 = vcmp.lt.s32.totalorder %v1143, 0
        %v1145 = vsub.s32 0, %v1143
        %v1146 = vsel %vm1144, %v1145, %v1143
        %v1147 = vclz %v1146
        %v1148 = vsub.s32 %v1147, 2
        %vm1149 = vcmp.gt.s32.totalorder 0, %v1148
        %v1150 = vsel %vm1149, 0, %v1148
        %v1151 = vsub.s32 32, %v1150
        %v1152 = vshll.u32 %v1143, %v1150
        %v1153 = vshrl.u32 %v1135, %v1151
        %v1154 = vor.u32 %v1152, %v1153
        %v1155 = vsub.s32 4294967266, %v1150
        %v1156 = vadd.s32 %v1155, 127
        %v1157 = vshll.u32 %v1156, 23
        %v1158 = vor.u32 4788187, %v1157
        %v1159 = vand.u32 2147483647, %v1158
        %v1161 = vcvt.s32.f32 %v1154
        %v1162 = vmul.f32 %v1161, %v1159
        %v1163 = vxor.u32 %v1162, 2147483648
        %v1164 = vsel %vm1081, %v1163, %v1162
        %v1165 = vsub.s32 4, %v1141
        %v1166 = vsel %vm1081, %v1165, %v1141
        %v1167 = vsel %vm1080, %v973, %v1164
        %v1168 = vsel %vm1080, 0, %v1166
        %v1169 = vcosq.f32.pop %v1167
        %v1170 = vsinq.f32.pop %v1167
        %vm1171 = vweird.f32 %v973
        %v1172 = vand.u32 %v1168, 3
        %vm1173 = vcmp.lt.s32.totalorder %v1172, 2
        %vm1174 = vcmp.eq.s32.totalorder %v1172, 0
        %v1175 = vxor.u32 %v1170, 2147483648
        %v1176 = vsel %vm1174, %v1169, %v1175
        %vm1177 = vcmp.eq.s32.totalorder %v1172, 2
        %v1178 = vxor.u32 %v1169, 2147483648
        %v1179 = vsel %vm1177, %v1178, %v1170
        %v1180 = vsel %vm1173, %v1176, %v1179
        %v1181 = vsel %vm1171, nan, %v1180
        %1182 = vst [vmem:[%s131 + $0x1e] sm:$0x7] %v1181
        %v1183 = vmul.f32 %v132, 32.0
        %v1184 = vand.u32 2147483647, %v1183
        %vm1185 = vcmp.le.f32.partialorder %v1184, 0.7853982
        %vm1186 = vcmp.lt.s32.totalorder %v1183, 0
        %v1187 = vand.u32 %v1183, 2139095040
        %v1188 = vshrl.u32 %v1187, 23
        %v1189 = vsub.s32 %v1188, 127
        %v1190 = vand.u32 2147483647, %v1183
        %v1191 = vand.u32 %v1190, 8388607
        %v1192 = vor.u32 %v1191, 8388608
        %v1193 = vsub.s32 0, %v1192
        %v1194 = vadd.s32 %v1189, 1
        %vm1195 = vcmp.gt.s32.totalorder %v1194, 0
        %v1196 = vsel %vm1195, %v1194, 0
        %v1197 = vshrl.u32 %v1196, 5
        %v1198 = vand.u32 %v1196, 31
        %v1199 = vsub.s32 32, %v1198
        %v1200 = vshrl.u32 683565275, %v1199
        %v1201 = vshll.u32 683565275, %v1198
        %v1202 = vshrl.u32 2475754826, %v1199
        %v1203 = vor.u32 %v1201, %v1202
        %v1204 = vshll.u32 2475754826, %v1198
        %v1205 = vshrl.u32 2131351028, %v1199
        %v1206 = vor.u32 %v1204, %v1205
        %v1207 = vshll.u32 2131351028, %v1198
        %v1208 = vshrl.u32 2102212464, %v1199
        %v1209 = vor.u32 %v1207, %v1208
        %v1210 = vshll.u32 2102212464, %v1198
        %v1211 = vshrl.u32 920167782, %v1199
        %v1212 = vor.u32 %v1210, %v1211
        %v1213 = vshll.u32 920167782, %v1198
        %v1214 = vshrl.u32 1326507024, %v1199
        %v1215 = vor.u32 %v1213, %v1214
        %vm1216 = vcmp.lt.s32.totalorder %v1197, 1
        %vm1217 = vcmp.lt.s32.totalorder %v1197, 2
        %vm1218 = vcmp.lt.s32.totalorder %v1197, 3
        %vm1219 = vcmp.lt.s32.totalorder %v1197, 4
        %v1220 = vsel %vm1216, %v1200, %v1203
        %v1221 = vsel %vm1219, %v1209, 2102212464
        %v1222 = vsel %vm1218, %v1206, %v1221
        %v1223 = vsel %vm1217, %v1220, %v1222
        %v1224 = vsel %vm1216, %v1203, %v1206
        %v1225 = vsel %vm1219, %v1212, 920167782
        %v1226 = vsel %vm1218, %v1209, %v1225
        %v1227 = vsel %vm1217, %v1224, %v1226
        %v1228 = vsel %vm1216, %v1206, %v1209
        %v1229 = vsel %vm1219, %v1215, 1326507024
        %v1230 = vsel %vm1218, %v1212, %v1229
        %v1231 = vsel %vm1217, %v1228, %v1230
        %v1232 = vshll.u32 %v1192, 8
        %v1233 = vmul.u32.u64.compose %v1232, %v1231
        %v1234 = vextract.low.u32 %v1233
        %v1235 = vextract.high.u32 %v1233
        %v1236 = vmul.u32.u64.compose %v1232, %v1227
        %v1237 = vextract.low.u32 %v1236
        %v1238 = vextract.high.u32 %v1236
        %v1239 = vmul.u32 %v1232, %v1223
        %v1240 = vadd.s32 %v1235, %v1237
        %vm1241 = vc.u32 %v1235, %v1237
        %v1242 = vadd.s32 %v1238, 1
        %v1243 = vsel %vm1241, %v1242, %v1238
        %v1244 = vadd.s32 %v1239, %v1243
        %v1245 = vadd.s32 %v1244, 536870912
        %v1246 = vshrl.u32 %v1245, 30
        %v1247 = vshll.u32 %v1246, 30
        %v1248 = vsub.s32 %v1244, %v1247
        %vm1249 = vcmp.lt.s32.totalorder %v1248, 0
        %v1250 = vsub.s32 0, %v1248
        %v1251 = vsel %vm1249, %v1250, %v1248
        %v1252 = vclz %v1251
        %v1253 = vsub.s32 %v1252, 2
        %vm1254 = vcmp.gt.s32.totalorder 0, %v1253
        %v1255 = vsel %vm1254, 0, %v1253
        %v1256 = vsub.s32 32, %v1255
        %v1257 = vshll.u32 %v1248, %v1255
        %v1258 = vshrl.u32 %v1240, %v1256
        %v1259 = vor.u32 %v1257, %v1258
        %v1260 = vsub.s32 4294967266, %v1255
        %v1261 = vadd.s32 %v1260, 127
        %v1262 = vshll.u32 %v1261, 23
        %v1263 = vor.u32 4788187, %v1262
        %v1264 = vand.u32 2147483647, %v1263
        %v1266 = vcvt.s32.f32 %v1259
        %v1267 = vmul.f32 %v1266, %v1264
        %v1268 = vxor.u32 %v1267, 2147483648
        %v1269 = vsel %vm1186, %v1268, %v1267
        %v1270 = vsub.s32 4, %v1246
        %v1271 = vsel %vm1186, %v1270, %v1246
        %v1272 = vsel %vm1185, %v1183, %v1269
        %v1273 = vsel %vm1185, 0, %v1271
        %v1274 = vcosq.f32.pop %v1272
        %v1275 = vsinq.f32.pop %v1272
        %vm1276 = vweird.f32 %v1183
        %v1277 = vadd.s32 %v1273, 3
        %v1278 = vand.u32 %v1277, 3
        %vm1279 = vcmp.lt.s32.totalorder %v1278, 2
        %vm1280 = vcmp.eq.s32.totalorder %v1278, 0
        %v1281 = vxor.u32 %v1275, 2147483648
        %v1282 = vsel %vm1280, %v1274, %v1281
        %vm1283 = vcmp.eq.s32.totalorder %v1278, 2
        %v1284 = vxor.u32 %v1274, 2147483648
        %v1285 = vsel %vm1283, %v1284, %v1275
        %v1286 = vsel %vm1279, %v1282, %v1285
        %v1287 = vsel %vm1276, nan, %v1286
        %1288 = vst [vmem:[%s131 + $0x21] sm:$0x7] %v1287
        %v1289 = vand.u32 2147483647, %v1183
        %vm1290 = vcmp.le.f32.partialorder %v1289, 0.7853982
        %vm1291 = vcmp.lt.s32.totalorder %v1183, 0
        %v1292 = vand.u32 %v1183, 2139095040
        %v1293 = vshrl.u32 %v1292, 23
        %v1294 = vsub.s32 %v1293, 127
        %v1295 = vand.u32 2147483647, %v1183
        %v1296 = vand.u32 %v1295, 8388607
        %v1297 = vor.u32 %v1296, 8388608
        %v1298 = vsub.s32 0, %v1297
        %v1299 = vadd.s32 %v1294, 1
        %vm1300 = vcmp.gt.s32.totalorder %v1299, 0
        %v1301 = vsel %vm1300, %v1299, 0
        %v1302 = vshrl.u32 %v1301, 5
        %v1303 = vand.u32 %v1301, 31
        %v1304 = vsub.s32 32, %v1303
        %v1305 = vshrl.u32 683565275, %v1304
        %v1306 = vshll.u32 683565275, %v1303
        %v1307 = vshrl.u32 2475754826, %v1304
        %v1308 = vor.u32 %v1306, %v1307
        %v1309 = vshll.u32 2475754826, %v1303
        %v1310 = vshrl.u32 2131351028, %v1304
        %v1311 = vor.u32 %v1309, %v1310
        %v1312 = vshll.u32 2131351028, %v1303
        %v1313 = vshrl.u32 2102212464, %v1304
        %v1314 = vor.u32 %v1312, %v1313
        %v1315 = vshll.u32 2102212464, %v1303
        %v1316 = vshrl.u32 920167782, %v1304
        %v1317 = vor.u32 %v1315, %v1316
        %v1318 = vshll.u32 920167782, %v1303
        %v1319 = vshrl.u32 1326507024, %v1304
        %v1320 = vor.u32 %v1318, %v1319
        %vm1321 = vcmp.lt.s32.totalorder %v1302, 1
        %vm1322 = vcmp.lt.s32.totalorder %v1302, 2
        %vm1323 = vcmp.lt.s32.totalorder %v1302, 3
        %vm1324 = vcmp.lt.s32.totalorder %v1302, 4
        %v1325 = vsel %vm1321, %v1305, %v1308
        %v1326 = vsel %vm1324, %v1314, 2102212464
        %v1327 = vsel %vm1323, %v1311, %v1326
        %v1328 = vsel %vm1322, %v1325, %v1327
        %v1329 = vsel %vm1321, %v1308, %v1311
        %v1330 = vsel %vm1324, %v1317, 920167782
        %v1331 = vsel %vm1323, %v1314, %v1330
        %v1332 = vsel %vm1322, %v1329, %v1331
        %v1333 = vsel %vm1321, %v1311, %v1314
        %v1334 = vsel %vm1324, %v1320, 1326507024
        %v1335 = vsel %vm1323, %v1317, %v1334
        %v1336 = vsel %vm1322, %v1333, %v1335
        %v1337 = vshll.u32 %v1297, 8
        %v1338 = vmul.u32.u64.compose %v1337, %v1336
        %v1339 = vextract.low.u32 %v1338
        %v1340 = vextract.high.u32 %v1338
        %v1341 = vmul.u32.u64.compose %v1337, %v1332
        %v1342 = vextract.low.u32 %v1341
        %v1343 = vextract.high.u32 %v1341
        %v1344 = vmul.u32 %v1337, %v1328
        %v1345 = vadd.s32 %v1340, %v1342
        %vm1346 = vc.u32 %v1340, %v1342
        %v1347 = vadd.s32 %v1343, 1
        %v1348 = vsel %vm1346, %v1347, %v1343
        %v1349 = vadd.s32 %v1344, %v1348
        %v1350 = vadd.s32 %v1349, 536870912
        %v1351 = vshrl.u32 %v1350, 30
        %v1352 = vshll.u32 %v1351, 30
        %v1353 = vsub.s32 %v1349, %v1352
        %vm1354 = vcmp.lt.s32.totalorder %v1353, 0
        %v1355 = vsub.s32 0, %v1353
        %v1356 = vsel %vm1354, %v1355, %v1353
        %v1357 = vclz %v1356
        %v1358 = vsub.s32 %v1357, 2
        %vm1359 = vcmp.gt.s32.totalorder 0, %v1358
        %v1360 = vsel %vm1359, 0, %v1358
        %v1361 = vsub.s32 32, %v1360
        %v1362 = vshll.u32 %v1353, %v1360
        %v1363 = vshrl.u32 %v1345, %v1361
        %v1364 = vor.u32 %v1362, %v1363
        %v1365 = vsub.s32 4294967266, %v1360
        %v1366 = vadd.s32 %v1365, 127
        %v1367 = vshll.u32 %v1366, 23
        %v1368 = vor.u32 4788187, %v1367
        %v1369 = vand.u32 2147483647, %v1368
        %v1371 = vcvt.s32.f32 %v1364
        %v1372 = vmul.f32 %v1371, %v1369
        %v1373 = vxor.u32 %v1372, 2147483648
        %v1374 = vsel %vm1291, %v1373, %v1372
        %v1375 = vsub.s32 4, %v1351
        %v1376 = vsel %vm1291, %v1375, %v1351
        %v1377 = vsel %vm1290, %v1183, %v1374
        %v1378 = vsel %vm1290, 0, %v1376
        %v1379 = vcosq.f32.pop %v1377
        %v1380 = vsinq.f32.pop %v1377
        %vm1381 = vweird.f32 %v1183
        %v1382 = vand.u32 %v1378, 3
        %vm1383 = vcmp.lt.s32.totalorder %v1382, 2
        %vm1384 = vcmp.eq.s32.totalorder %v1382, 0
        %v1385 = vxor.u32 %v1380, 2147483648
        %v1386 = vsel %vm1384, %v1379, %v1385
        %vm1387 = vcmp.eq.s32.totalorder %v1382, 2
        %v1388 = vxor.u32 %v1379, 2147483648
        %v1389 = vsel %vm1387, %v1388, %v1380
        %v1390 = vsel %vm1383, %v1386, %v1389
        %v1391 = vsel %vm1381, nan, %v1390
        %1392 = vst [vmem:[%s131 + $0x24] sm:$0x7] %v1391
        %v1393 = vmul.f32 %v132, 64.0
        %v1394 = vand.u32 2147483647, %v1393
        %vm1395 = vcmp.le.f32.partialorder %v1394, 0.7853982
        %vm1396 = vcmp.lt.s32.totalorder %v1393, 0
        %v1397 = vand.u32 %v1393, 2139095040
        %v1398 = vshrl.u32 %v1397, 23
        %v1399 = vsub.s32 %v1398, 127
        %v1400 = vand.u32 2147483647, %v1393
        %v1401 = vand.u32 %v1400, 8388607
        %v1402 = vor.u32 %v1401, 8388608
        %v1403 = vsub.s32 0, %v1402
        %v1404 = vadd.s32 %v1399, 1
        %vm1405 = vcmp.gt.s32.totalorder %v1404, 0
        %v1406 = vsel %vm1405, %v1404, 0
        %v1407 = vshrl.u32 %v1406, 5
        %v1408 = vand.u32 %v1406, 31
        %v1409 = vsub.s32 32, %v1408
        %v1410 = vshrl.u32 683565275, %v1409
        %v1411 = vshll.u32 683565275, %v1408
        %v1412 = vshrl.u32 2475754826, %v1409
        %v1413 = vor.u32 %v1411, %v1412
        %v1414 = vshll.u32 2475754826, %v1408
        %v1415 = vshrl.u32 2131351028, %v1409
        %v1416 = vor.u32 %v1414, %v1415
        %v1417 = vshll.u32 2131351028, %v1408
        %v1418 = vshrl.u32 2102212464, %v1409
        %v1419 = vor.u32 %v1417, %v1418
        %v1420 = vshll.u32 2102212464, %v1408
        %v1421 = vshrl.u32 920167782, %v1409
        %v1422 = vor.u32 %v1420, %v1421
        %v1423 = vshll.u32 920167782, %v1408
        %v1424 = vshrl.u32 1326507024, %v1409
        %v1425 = vor.u32 %v1423, %v1424
        %vm1426 = vcmp.lt.s32.totalorder %v1407, 1
        %vm1427 = vcmp.lt.s32.totalorder %v1407, 2
        %vm1428 = vcmp.lt.s32.totalorder %v1407, 3
        %vm1429 = vcmp.lt.s32.totalorder %v1407, 4
        %v1430 = vsel %vm1426, %v1410, %v1413
        %v1431 = vsel %vm1429, %v1419, 2102212464
        %v1432 = vsel %vm1428, %v1416, %v1431
        %v1433 = vsel %vm1427, %v1430, %v1432
        %v1434 = vsel %vm1426, %v1413, %v1416
        %v1435 = vsel %vm1429, %v1422, 920167782
        %v1436 = vsel %vm1428, %v1419, %v1435
        %v1437 = vsel %vm1427, %v1434, %v1436
        %v1438 = vsel %vm1426, %v1416, %v1419
        %v1439 = vsel %vm1429, %v1425, 1326507024
        %v1440 = vsel %vm1428, %v1422, %v1439
        %v1441 = vsel %vm1427, %v1438, %v1440
        %v1442 = vshll.u32 %v1402, 8
        %v1443 = vmul.u32.u64.compose %v1442, %v1441
        %v1444 = vextract.low.u32 %v1443
        %v1445 = vextract.high.u32 %v1443
        %v1446 = vmul.u32.u64.compose %v1442, %v1437
        %v1447 = vextract.low.u32 %v1446
        %v1448 = vextract.high.u32 %v1446
        %v1449 = vmul.u32 %v1442, %v1433
        %v1450 = vadd.s32 %v1445, %v1447
        %vm1451 = vc.u32 %v1445, %v1447
        %v1452 = vadd.s32 %v1448, 1
        %v1453 = vsel %vm1451, %v1452, %v1448
        %v1454 = vadd.s32 %v1449, %v1453
        %v1455 = vadd.s32 %v1454, 536870912
        %v1456 = vshrl.u32 %v1455, 30
        %v1457 = vshll.u32 %v1456, 30
        %v1458 = vsub.s32 %v1454, %v1457
        %vm1459 = vcmp.lt.s32.totalorder %v1458, 0
        %v1460 = vsub.s32 0, %v1458
        %v1461 = vsel %vm1459, %v1460, %v1458
        %v1462 = vclz %v1461
        %v1463 = vsub.s32 %v1462, 2
        %vm1464 = vcmp.gt.s32.totalorder 0, %v1463
        %v1465 = vsel %vm1464, 0, %v1463
        %v1466 = vsub.s32 32, %v1465
        %v1467 = vshll.u32 %v1458, %v1465
        %v1468 = vshrl.u32 %v1450, %v1466
        %v1469 = vor.u32 %v1467, %v1468
        %v1470 = vsub.s32 4294967266, %v1465
        %v1471 = vadd.s32 %v1470, 127
        %v1472 = vshll.u32 %v1471, 23
        %v1473 = vor.u32 4788187, %v1472
        %v1474 = vand.u32 2147483647, %v1473
        %v1476 = vcvt.s32.f32 %v1469
        %v1477 = vmul.f32 %v1476, %v1474
        %v1478 = vxor.u32 %v1477, 2147483648
        %v1479 = vsel %vm1396, %v1478, %v1477
        %v1480 = vsub.s32 4, %v1456
        %v1481 = vsel %vm1396, %v1480, %v1456
        %v1482 = vsel %vm1395, %v1393, %v1479
        %v1483 = vsel %vm1395, 0, %v1481
        %v1484 = vcosq.f32.pop %v1482
        %v1485 = vsinq.f32.pop %v1482
        %vm1486 = vweird.f32 %v1393
        %v1487 = vadd.s32 %v1483, 3
        %v1488 = vand.u32 %v1487, 3
        %vm1489 = vcmp.lt.s32.totalorder %v1488, 2
        %vm1490 = vcmp.eq.s32.totalorder %v1488, 0
        %v1491 = vxor.u32 %v1485, 2147483648
        %v1492 = vsel %vm1490, %v1484, %v1491
        %vm1493 = vcmp.eq.s32.totalorder %v1488, 2
        %v1494 = vxor.u32 %v1484, 2147483648
        %v1495 = vsel %vm1493, %v1494, %v1485
        %v1496 = vsel %vm1489, %v1492, %v1495
        %v1497 = vsel %vm1486, nan, %v1496
        %1498 = vst [vmem:[%s131 + $0x27] sm:$0x7] %v1497
        %v1499 = vand.u32 2147483647, %v1393
        %vm1500 = vcmp.le.f32.partialorder %v1499, 0.7853982
        %vm1501 = vcmp.lt.s32.totalorder %v1393, 0
        %v1502 = vand.u32 %v1393, 2139095040
        %v1503 = vshrl.u32 %v1502, 23
        %v1504 = vsub.s32 %v1503, 127
        %v1505 = vand.u32 2147483647, %v1393
        %v1506 = vand.u32 %v1505, 8388607
        %v1507 = vor.u32 %v1506, 8388608
        %v1508 = vsub.s32 0, %v1507
        %v1509 = vadd.s32 %v1504, 1
        %vm1510 = vcmp.gt.s32.totalorder %v1509, 0
        %v1511 = vsel %vm1510, %v1509, 0
        %v1512 = vshrl.u32 %v1511, 5
        %v1513 = vand.u32 %v1511, 31
        %v1514 = vsub.s32 32, %v1513
        %v1515 = vshrl.u32 683565275, %v1514
        %v1516 = vshll.u32 683565275, %v1513
        %v1517 = vshrl.u32 2475754826, %v1514
        %v1518 = vor.u32 %v1516, %v1517
        %v1519 = vshll.u32 2475754826, %v1513
        %v1520 = vshrl.u32 2131351028, %v1514
        %v1521 = vor.u32 %v1519, %v1520
        %v1522 = vshll.u32 2131351028, %v1513
        %v1523 = vshrl.u32 2102212464, %v1514
        %v1524 = vor.u32 %v1522, %v1523
        %v1525 = vshll.u32 2102212464, %v1513
        %v1526 = vshrl.u32 920167782, %v1514
        %v1527 = vor.u32 %v1525, %v1526
        %v1528 = vshll.u32 920167782, %v1513
        %v1529 = vshrl.u32 1326507024, %v1514
        %v1530 = vor.u32 %v1528, %v1529
        %vm1531 = vcmp.lt.s32.totalorder %v1512, 1
        %vm1532 = vcmp.lt.s32.totalorder %v1512, 2
        %vm1533 = vcmp.lt.s32.totalorder %v1512, 3
        %vm1534 = vcmp.lt.s32.totalorder %v1512, 4
        %v1535 = vsel %vm1531, %v1515, %v1518
        %v1536 = vsel %vm1534, %v1524, 2102212464
        %v1537 = vsel %vm1533, %v1521, %v1536
        %v1538 = vsel %vm1532, %v1535, %v1537
        %v1539 = vsel %vm1531, %v1518, %v1521
        %v1540 = vsel %vm1534, %v1527, 920167782
        %v1541 = vsel %vm1533, %v1524, %v1540
        %v1542 = vsel %vm1532, %v1539, %v1541
        %v1543 = vsel %vm1531, %v1521, %v1524
        %v1544 = vsel %vm1534, %v1530, 1326507024
        %v1545 = vsel %vm1533, %v1527, %v1544
        %v1546 = vsel %vm1532, %v1543, %v1545
        %v1547 = vshll.u32 %v1507, 8
        %v1548 = vmul.u32.u64.compose %v1547, %v1546
        %v1549 = vextract.low.u32 %v1548
        %v1550 = vextract.high.u32 %v1548
        %v1551 = vmul.u32.u64.compose %v1547, %v1542
        %v1552 = vextract.low.u32 %v1551
        %v1553 = vextract.high.u32 %v1551
        %v1554 = vmul.u32 %v1547, %v1538
        %v1555 = vadd.s32 %v1550, %v1552
        %vm1556 = vc.u32 %v1550, %v1552
        %v1557 = vadd.s32 %v1553, 1
        %v1558 = vsel %vm1556, %v1557, %v1553
        %v1559 = vadd.s32 %v1554, %v1558
        %v1560 = vadd.s32 %v1559, 536870912
        %v1561 = vshrl.u32 %v1560, 30
        %v1562 = vshll.u32 %v1561, 30
        %v1563 = vsub.s32 %v1559, %v1562
        %vm1564 = vcmp.lt.s32.totalorder %v1563, 0
        %v1565 = vsub.s32 0, %v1563
        %v1566 = vsel %vm1564, %v1565, %v1563
        %v1567 = vclz %v1566
        %v1568 = vsub.s32 %v1567, 2
        %vm1569 = vcmp.gt.s32.totalorder 0, %v1568
        %v1570 = vsel %vm1569, 0, %v1568
        %v1571 = vsub.s32 32, %v1570
        %v1572 = vshll.u32 %v1563, %v1570
        %v1573 = vshrl.u32 %v1555, %v1571
        %v1574 = vor.u32 %v1572, %v1573
        %v1575 = vsub.s32 4294967266, %v1570
        %v1576 = vadd.s32 %v1575, 127
        %v1577 = vshll.u32 %v1576, 23
        %v1578 = vor.u32 4788187, %v1577
        %v1579 = vand.u32 2147483647, %v1578
        %v1581 = vcvt.s32.f32 %v1574
        %v1582 = vmul.f32 %v1581, %v1579
        %v1583 = vxor.u32 %v1582, 2147483648
        %v1584 = vsel %vm1501, %v1583, %v1582
        %v1585 = vsub.s32 4, %v1561
        %v1586 = vsel %vm1501, %v1585, %v1561
        %v1587 = vsel %vm1500, %v1393, %v1584
        %v1588 = vsel %vm1500, 0, %v1586
        %v1589 = vcosq.f32.pop %v1587
        %v1590 = vsinq.f32.pop %v1587
        %vm1591 = vweird.f32 %v1393
        %v1592 = vand.u32 %v1588, 3
        %vm1593 = vcmp.lt.s32.totalorder %v1592, 2
        %vm1594 = vcmp.eq.s32.totalorder %v1592, 0
        %v1595 = vxor.u32 %v1590, 2147483648
        %v1596 = vsel %vm1594, %v1589, %v1595
        %vm1597 = vcmp.eq.s32.totalorder %v1592, 2
        %v1598 = vxor.u32 %v1589, 2147483648
        %v1599 = vsel %vm1597, %v1598, %v1590
        %v1600 = vsel %vm1593, %v1596, %v1599
        %v1601 = vsel %vm1591, nan, %v1600
        %1602 = vst [vmem:[%s131 + $0x2a] sm:$0x7] %v1601
        %v1603 = vmul.f32 %v132, 128.0
        %v1604 = vand.u32 2147483647, %v1603
        %vm1605 = vcmp.le.f32.partialorder %v1604, 0.7853982
        %vm1606 = vcmp.lt.s32.totalorder %v1603, 0
        %v1607 = vand.u32 %v1603, 2139095040
        %v1608 = vshrl.u32 %v1607, 23
        %v1609 = vsub.s32 %v1608, 127
        %v1610 = vand.u32 2147483647, %v1603
        %v1611 = vand.u32 %v1610, 8388607
        %v1612 = vor.u32 %v1611, 8388608
        %v1613 = vsub.s32 0, %v1612
        %v1614 = vadd.s32 %v1609, 1
        %vm1615 = vcmp.gt.s32.totalorder %v1614, 0
        %v1616 = vsel %vm1615, %v1614, 0
        %v1617 = vshrl.u32 %v1616, 5
        %v1618 = vand.u32 %v1616, 31
        %v1619 = vsub.s32 32, %v1618
        %v1620 = vshrl.u32 683565275, %v1619
        %v1621 = vshll.u32 683565275, %v1618
        %v1622 = vshrl.u32 2475754826, %v1619
        %v1623 = vor.u32 %v1621, %v1622
        %v1624 = vshll.u32 2475754826, %v1618
        %v1625 = vshrl.u32 2131351028, %v1619
        %v1626 = vor.u32 %v1624, %v1625
        %v1627 = vshll.u32 2131351028, %v1618
        %v1628 = vshrl.u32 2102212464, %v1619
        %v1629 = vor.u32 %v1627, %v1628
        %v1630 = vshll.u32 2102212464, %v1618
        %v1631 = vshrl.u32 920167782, %v1619
        %v1632 = vor.u32 %v1630, %v1631
        %v1633 = vshll.u32 920167782, %v1618
        %v1634 = vshrl.u32 1326507024, %v1619
        %v1635 = vor.u32 %v1633, %v1634
        %vm1636 = vcmp.lt.s32.totalorder %v1617, 1
        %vm1637 = vcmp.lt.s32.totalorder %v1617, 2
        %vm1638 = vcmp.lt.s32.totalorder %v1617, 3
        %vm1639 = vcmp.lt.s32.totalorder %v1617, 4
        %v1640 = vsel %vm1636, %v1620, %v1623
        %v1641 = vsel %vm1639, %v1629, 2102212464
        %v1642 = vsel %vm1638, %v1626, %v1641
        %v1643 = vsel %vm1637, %v1640, %v1642
        %v1644 = vsel %vm1636, %v1623, %v1626
        %v1645 = vsel %vm1639, %v1632, 920167782
        %v1646 = vsel %vm1638, %v1629, %v1645
        %v1647 = vsel %vm1637, %v1644, %v1646
        %v1648 = vsel %vm1636, %v1626, %v1629
        %v1649 = vsel %vm1639, %v1635, 1326507024
        %v1650 = vsel %vm1638, %v1632, %v1649
        %v1651 = vsel %vm1637, %v1648, %v1650
        %v1652 = vshll.u32 %v1612, 8
        %v1653 = vmul.u32.u64.compose %v1652, %v1651
        %v1654 = vextract.low.u32 %v1653
        %v1655 = vextract.high.u32 %v1653
        %v1656 = vmul.u32.u64.compose %v1652, %v1647
        %v1657 = vextract.low.u32 %v1656
        %v1658 = vextract.high.u32 %v1656
        %v1659 = vmul.u32 %v1652, %v1643
        %v1660 = vadd.s32 %v1655, %v1657
        %vm1661 = vc.u32 %v1655, %v1657
        %v1662 = vadd.s32 %v1658, 1
        %v1663 = vsel %vm1661, %v1662, %v1658
        %v1664 = vadd.s32 %v1659, %v1663
        %v1665 = vadd.s32 %v1664, 536870912
        %v1666 = vshrl.u32 %v1665, 30
        %v1667 = vshll.u32 %v1666, 30
        %v1668 = vsub.s32 %v1664, %v1667
        %vm1669 = vcmp.lt.s32.totalorder %v1668, 0
        %v1670 = vsub.s32 0, %v1668
        %v1671 = vsel %vm1669, %v1670, %v1668
        %v1672 = vclz %v1671
        %v1673 = vsub.s32 %v1672, 2
        %vm1674 = vcmp.gt.s32.totalorder 0, %v1673
        %v1675 = vsel %vm1674, 0, %v1673
        %v1676 = vsub.s32 32, %v1675
        %v1677 = vshll.u32 %v1668, %v1675
        %v1678 = vshrl.u32 %v1660, %v1676
        %v1679 = vor.u32 %v1677, %v1678
        %v1680 = vsub.s32 4294967266, %v1675
        %v1681 = vadd.s32 %v1680, 127
        %v1682 = vshll.u32 %v1681, 23
        %v1683 = vor.u32 4788187, %v1682
        %v1684 = vand.u32 2147483647, %v1683
        %v1686 = vcvt.s32.f32 %v1679
        %v1687 = vmul.f32 %v1686, %v1684
        %v1688 = vxor.u32 %v1687, 2147483648
        %v1689 = vsel %vm1606, %v1688, %v1687
        %v1690 = vsub.s32 4, %v1666
        %v1691 = vsel %vm1606, %v1690, %v1666
        %v1692 = vsel %vm1605, %v1603, %v1689
        %v1693 = vsel %vm1605, 0, %v1691
        %v1694 = vcosq.f32.pop %v1692
        %v1695 = vsinq.f32.pop %v1692
        %vm1696 = vweird.f32 %v1603
        %v1697 = vadd.s32 %v1693, 3
        %v1698 = vand.u32 %v1697, 3
        %vm1699 = vcmp.lt.s32.totalorder %v1698, 2
        %vm1700 = vcmp.eq.s32.totalorder %v1698, 0
        %v1701 = vxor.u32 %v1695, 2147483648
        %v1702 = vsel %vm1700, %v1694, %v1701
        %vm1703 = vcmp.eq.s32.totalorder %v1698, 2
        %v1704 = vxor.u32 %v1694, 2147483648
        %v1705 = vsel %vm1703, %v1704, %v1695
        %v1706 = vsel %vm1699, %v1702, %v1705
        %v1707 = vsel %vm1696, nan, %v1706
        %1708 = vst [vmem:[%s131 + $0x2d] sm:$0x7] %v1707
        %v1709 = vand.u32 2147483647, %v1603
        %vm1710 = vcmp.le.f32.partialorder %v1709, 0.7853982
        %vm1711 = vcmp.lt.s32.totalorder %v1603, 0
        %v1712 = vand.u32 %v1603, 2139095040
        %v1713 = vshrl.u32 %v1712, 23
        %v1714 = vsub.s32 %v1713, 127
        %v1715 = vand.u32 2147483647, %v1603
        %v1716 = vand.u32 %v1715, 8388607
        %v1717 = vor.u32 %v1716, 8388608
        %v1718 = vsub.s32 0, %v1717
        %v1719 = vadd.s32 %v1714, 1
        %vm1720 = vcmp.gt.s32.totalorder %v1719, 0
        %v1721 = vsel %vm1720, %v1719, 0
        %v1722 = vshrl.u32 %v1721, 5
        %v1723 = vand.u32 %v1721, 31
        %v1724 = vsub.s32 32, %v1723
        %v1725 = vshrl.u32 683565275, %v1724
        %v1726 = vshll.u32 683565275, %v1723
        %v1727 = vshrl.u32 2475754826, %v1724
        %v1728 = vor.u32 %v1726, %v1727
        %v1729 = vshll.u32 2475754826, %v1723
        %v1730 = vshrl.u32 2131351028, %v1724
        %v1731 = vor.u32 %v1729, %v1730
        %v1732 = vshll.u32 2131351028, %v1723
        %v1733 = vshrl.u32 2102212464, %v1724
        %v1734 = vor.u32 %v1732, %v1733
        %v1735 = vshll.u32 2102212464, %v1723
        %v1736 = vshrl.u32 920167782, %v1724
        %v1737 = vor.u32 %v1735, %v1736
        %v1738 = vshll.u32 920167782, %v1723
        %v1739 = vshrl.u32 1326507024, %v1724
        %v1740 = vor.u32 %v1738, %v1739
        %vm1741 = vcmp.lt.s32.totalorder %v1722, 1
        %vm1742 = vcmp.lt.s32.totalorder %v1722, 2
        %vm1743 = vcmp.lt.s32.totalorder %v1722, 3
        %vm1744 = vcmp.lt.s32.totalorder %v1722, 4
        %v1745 = vsel %vm1741, %v1725, %v1728
        %v1746 = vsel %vm1744, %v1734, 2102212464
        %v1747 = vsel %vm1743, %v1731, %v1746
        %v1748 = vsel %vm1742, %v1745, %v1747
        %v1749 = vsel %vm1741, %v1728, %v1731
        %v1750 = vsel %vm1744, %v1737, 920167782
        %v1751 = vsel %vm1743, %v1734, %v1750
        %v1752 = vsel %vm1742, %v1749, %v1751
        %v1753 = vsel %vm1741, %v1731, %v1734
        %v1754 = vsel %vm1744, %v1740, 1326507024
        %v1755 = vsel %vm1743, %v1737, %v1754
        %v1756 = vsel %vm1742, %v1753, %v1755
        %v1757 = vshll.u32 %v1717, 8
        %v1758 = vmul.u32.u64.compose %v1757, %v1756
        %v1759 = vextract.low.u32 %v1758
        %v1760 = vextract.high.u32 %v1758
        %v1761 = vmul.u32.u64.compose %v1757, %v1752
        %v1762 = vextract.low.u32 %v1761
        %v1763 = vextract.high.u32 %v1761
        %v1764 = vmul.u32 %v1757, %v1748
        %v1765 = vadd.s32 %v1760, %v1762
        %vm1766 = vc.u32 %v1760, %v1762
        %v1767 = vadd.s32 %v1763, 1
        %v1768 = vsel %vm1766, %v1767, %v1763
        %v1769 = vadd.s32 %v1764, %v1768
        %v1770 = vadd.s32 %v1769, 536870912
        %v1771 = vshrl.u32 %v1770, 30
        %v1772 = vshll.u32 %v1771, 30
        %v1773 = vsub.s32 %v1769, %v1772
        %vm1774 = vcmp.lt.s32.totalorder %v1773, 0
        %v1775 = vsub.s32 0, %v1773
        %v1776 = vsel %vm1774, %v1775, %v1773
        %v1777 = vclz %v1776
        %v1778 = vsub.s32 %v1777, 2
        %vm1779 = vcmp.gt.s32.totalorder 0, %v1778
        %v1780 = vsel %vm1779, 0, %v1778
        %v1781 = vsub.s32 32, %v1780
        %v1782 = vshll.u32 %v1773, %v1780
        %v1783 = vshrl.u32 %v1765, %v1781
        %v1784 = vor.u32 %v1782, %v1783
        %v1785 = vsub.s32 4294967266, %v1780
        %v1786 = vadd.s32 %v1785, 127
        %v1787 = vshll.u32 %v1786, 23
        %v1788 = vor.u32 4788187, %v1787
        %v1789 = vand.u32 2147483647, %v1788
        %v1791 = vcvt.s32.f32 %v1784
        %v1792 = vmul.f32 %v1791, %v1789
        %v1793 = vxor.u32 %v1792, 2147483648
        %v1794 = vsel %vm1711, %v1793, %v1792
        %v1795 = vsub.s32 4, %v1771
        %v1796 = vsel %vm1711, %v1795, %v1771
        %v1797 = vsel %vm1710, %v1603, %v1794
        %v1798 = vsel %vm1710, 0, %v1796
        %v1799 = vcosq.f32.pop %v1797
        %v1800 = vsinq.f32.pop %v1797
        %vm1801 = vweird.f32 %v1603
        %v1802 = vand.u32 %v1798, 3
        %vm1803 = vcmp.lt.s32.totalorder %v1802, 2
        %vm1804 = vcmp.eq.s32.totalorder %v1802, 0
        %v1805 = vxor.u32 %v1800, 2147483648
        %v1806 = vsel %vm1804, %v1799, %v1805
        %vm1807 = vcmp.eq.s32.totalorder %v1802, 2
        %v1808 = vxor.u32 %v1799, 2147483648
        %v1809 = vsel %vm1807, %v1808, %v1800
        %v1810 = vsel %vm1803, %v1806, %v1809
        %v1811 = vsel %vm1801, nan, %v1810
        %1812 = vst [vmem:[%s131 + $0x30] sm:$0x7] %v1811
        %v1813 = vmul.f32 %v132, 256.0
        %v1814 = vand.u32 2147483647, %v1813
        %vm1815 = vcmp.le.f32.partialorder %v1814, 0.7853982
        %vm1816 = vcmp.lt.s32.totalorder %v1813, 0
        %v1817 = vand.u32 %v1813, 2139095040
        %v1818 = vshrl.u32 %v1817, 23
        %v1819 = vsub.s32 %v1818, 127
        %v1820 = vand.u32 2147483647, %v1813
        %v1821 = vand.u32 %v1820, 8388607
        %v1822 = vor.u32 %v1821, 8388608
        %v1823 = vsub.s32 0, %v1822
        %v1824 = vadd.s32 %v1819, 1
        %vm1825 = vcmp.gt.s32.totalorder %v1824, 0
        %v1826 = vsel %vm1825, %v1824, 0
        %v1827 = vshrl.u32 %v1826, 5
        %v1828 = vand.u32 %v1826, 31
        %v1829 = vsub.s32 32, %v1828
        %v1830 = vshrl.u32 683565275, %v1829
        %v1831 = vshll.u32 683565275, %v1828
        %v1832 = vshrl.u32 2475754826, %v1829
        %v1833 = vor.u32 %v1831, %v1832
        %v1834 = vshll.u32 2475754826, %v1828
        %v1835 = vshrl.u32 2131351028, %v1829
        %v1836 = vor.u32 %v1834, %v1835
        %v1837 = vshll.u32 2131351028, %v1828
        %v1838 = vshrl.u32 2102212464, %v1829
        %v1839 = vor.u32 %v1837, %v1838
        %v1840 = vshll.u32 2102212464, %v1828
        %v1841 = vshrl.u32 920167782, %v1829
        %v1842 = vor.u32 %v1840, %v1841
        %v1843 = vshll.u32 920167782, %v1828
        %v1844 = vshrl.u32 1326507024, %v1829
        %v1845 = vor.u32 %v1843, %v1844
        %vm1846 = vcmp.lt.s32.totalorder %v1827, 1
        %vm1847 = vcmp.lt.s32.totalorder %v1827, 2
        %vm1848 = vcmp.lt.s32.totalorder %v1827, 3
        %vm1849 = vcmp.lt.s32.totalorder %v1827, 4
        %v1850 = vsel %vm1846, %v1830, %v1833
        %v1851 = vsel %vm1849, %v1839, 2102212464
        %v1852 = vsel %vm1848, %v1836, %v1851
        %v1853 = vsel %vm1847, %v1850, %v1852
        %v1854 = vsel %vm1846, %v1833, %v1836
        %v1855 = vsel %vm1849, %v1842, 920167782
        %v1856 = vsel %vm1848, %v1839, %v1855
        %v1857 = vsel %vm1847, %v1854, %v1856
        %v1858 = vsel %vm1846, %v1836, %v1839
        %v1859 = vsel %vm1849, %v1845, 1326507024
        %v1860 = vsel %vm1848, %v1842, %v1859
        %v1861 = vsel %vm1847, %v1858, %v1860
        %v1862 = vshll.u32 %v1822, 8
        %v1863 = vmul.u32.u64.compose %v1862, %v1861
        %v1864 = vextract.low.u32 %v1863
        %v1865 = vextract.high.u32 %v1863
        %v1866 = vmul.u32.u64.compose %v1862, %v1857
        %v1867 = vextract.low.u32 %v1866
        %v1868 = vextract.high.u32 %v1866
        %v1869 = vmul.u32 %v1862, %v1853
        %v1870 = vadd.s32 %v1865, %v1867
        %vm1871 = vc.u32 %v1865, %v1867
        %v1872 = vadd.s32 %v1868, 1
        %v1873 = vsel %vm1871, %v1872, %v1868
        %v1874 = vadd.s32 %v1869, %v1873
        %v1875 = vadd.s32 %v1874, 536870912
        %v1876 = vshrl.u32 %v1875, 30
        %v1877 = vshll.u32 %v1876, 30
        %v1878 = vsub.s32 %v1874, %v1877
        %vm1879 = vcmp.lt.s32.totalorder %v1878, 0
        %v1880 = vsub.s32 0, %v1878
        %v1881 = vsel %vm1879, %v1880, %v1878
        %v1882 = vclz %v1881
        %v1883 = vsub.s32 %v1882, 2
        %vm1884 = vcmp.gt.s32.totalorder 0, %v1883
        %v1885 = vsel %vm1884, 0, %v1883
        %v1886 = vsub.s32 32, %v1885
        %v1887 = vshll.u32 %v1878, %v1885
        %v1888 = vshrl.u32 %v1870, %v1886
        %v1889 = vor.u32 %v1887, %v1888
        %v1890 = vsub.s32 4294967266, %v1885
        %v1891 = vadd.s32 %v1890, 127
        %v1892 = vshll.u32 %v1891, 23
        %v1893 = vor.u32 4788187, %v1892
        %v1894 = vand.u32 2147483647, %v1893
        %v1896 = vcvt.s32.f32 %v1889
        %v1897 = vmul.f32 %v1896, %v1894
        %v1898 = vxor.u32 %v1897, 2147483648
        %v1899 = vsel %vm1816, %v1898, %v1897
        %v1900 = vsub.s32 4, %v1876
        %v1901 = vsel %vm1816, %v1900, %v1876
        %v1902 = vsel %vm1815, %v1813, %v1899
        %v1903 = vsel %vm1815, 0, %v1901
        %v1904 = vcosq.f32.pop %v1902
        %v1905 = vsinq.f32.pop %v1902
        %vm1906 = vweird.f32 %v1813
        %v1907 = vadd.s32 %v1903, 3
        %v1908 = vand.u32 %v1907, 3
        %vm1909 = vcmp.lt.s32.totalorder %v1908, 2
        %vm1910 = vcmp.eq.s32.totalorder %v1908, 0
        %v1911 = vxor.u32 %v1905, 2147483648
        %v1912 = vsel %vm1910, %v1904, %v1911
        %vm1913 = vcmp.eq.s32.totalorder %v1908, 2
        %v1914 = vxor.u32 %v1904, 2147483648
        %v1915 = vsel %vm1913, %v1914, %v1905
        %v1916 = vsel %vm1909, %v1912, %v1915
        %v1917 = vsel %vm1906, nan, %v1916
        %1918 = vst [vmem:[%s131 + $0x33] sm:$0x7] %v1917
        %v1919 = vand.u32 2147483647, %v1813
        %vm1920 = vcmp.le.f32.partialorder %v1919, 0.7853982
        %vm1921 = vcmp.lt.s32.totalorder %v1813, 0
        %v1922 = vand.u32 %v1813, 2139095040
        %v1923 = vshrl.u32 %v1922, 23
        %v1924 = vsub.s32 %v1923, 127
        %v1925 = vand.u32 2147483647, %v1813
        %v1926 = vand.u32 %v1925, 8388607
        %v1927 = vor.u32 %v1926, 8388608
        %v1928 = vsub.s32 0, %v1927
        %v1929 = vadd.s32 %v1924, 1
        %vm1930 = vcmp.gt.s32.totalorder %v1929, 0
        %v1931 = vsel %vm1930, %v1929, 0
        %v1932 = vshrl.u32 %v1931, 5
        %v1933 = vand.u32 %v1931, 31
        %v1934 = vsub.s32 32, %v1933
        %v1935 = vshrl.u32 683565275, %v1934
        %v1936 = vshll.u32 683565275, %v1933
        %v1937 = vshrl.u32 2475754826, %v1934
        %v1938 = vor.u32 %v1936, %v1937
        %v1939 = vshll.u32 2475754826, %v1933
        %v1940 = vshrl.u32 2131351028, %v1934
        %v1941 = vor.u32 %v1939, %v1940
        %v1942 = vshll.u32 2131351028, %v1933
        %v1943 = vshrl.u32 2102212464, %v1934
        %v1944 = vor.u32 %v1942, %v1943
        %v1945 = vshll.u32 2102212464, %v1933
        %v1946 = vshrl.u32 920167782, %v1934
        %v1947 = vor.u32 %v1945, %v1946
        %v1948 = vshll.u32 920167782, %v1933
        %v1949 = vshrl.u32 1326507024, %v1934
        %v1950 = vor.u32 %v1948, %v1949
        %vm1951 = vcmp.lt.s32.totalorder %v1932, 1
        %vm1952 = vcmp.lt.s32.totalorder %v1932, 2
        %vm1953 = vcmp.lt.s32.totalorder %v1932, 3
        %vm1954 = vcmp.lt.s32.totalorder %v1932, 4
        %v1955 = vsel %vm1951, %v1935, %v1938
        %v1956 = vsel %vm1954, %v1944, 2102212464
        %v1957 = vsel %vm1953, %v1941, %v1956
        %v1958 = vsel %vm1952, %v1955, %v1957
        %v1959 = vsel %vm1951, %v1938, %v1941
        %v1960 = vsel %vm1954, %v1947, 920167782
        %v1961 = vsel %vm1953, %v1944, %v1960
        %v1962 = vsel %vm1952, %v1959, %v1961
        %v1963 = vsel %vm1951, %v1941, %v1944
        %v1964 = vsel %vm1954, %v1950, 1326507024
        %v1965 = vsel %vm1953, %v1947, %v1964
        %v1966 = vsel %vm1952, %v1963, %v1965
        %v1967 = vshll.u32 %v1927, 8
        %v1968 = vmul.u32.u64.compose %v1967, %v1966
        %v1969 = vextract.low.u32 %v1968
        %v1970 = vextract.high.u32 %v1968
        %v1971 = vmul.u32.u64.compose %v1967, %v1962
        %v1972 = vextract.low.u32 %v1971
        %v1973 = vextract.high.u32 %v1971
        %v1974 = vmul.u32 %v1967, %v1958
        %v1975 = vadd.s32 %v1970, %v1972
        %vm1976 = vc.u32 %v1970, %v1972
        %v1977 = vadd.s32 %v1973, 1
        %v1978 = vsel %vm1976, %v1977, %v1973
        %v1979 = vadd.s32 %v1974, %v1978
        %v1980 = vadd.s32 %v1979, 536870912
        %v1981 = vshrl.u32 %v1980, 30
        %v1982 = vshll.u32 %v1981, 30
        %v1983 = vsub.s32 %v1979, %v1982
        %vm1984 = vcmp.lt.s32.totalorder %v1983, 0
        %v1985 = vsub.s32 0, %v1983
        %v1986 = vsel %vm1984, %v1985, %v1983
        %v1987 = vclz %v1986
        %v1988 = vsub.s32 %v1987, 2
        %vm1989 = vcmp.gt.s32.totalorder 0, %v1988
        %v1990 = vsel %vm1989, 0, %v1988
        %v1991 = vsub.s32 32, %v1990
        %v1992 = vshll.u32 %v1983, %v1990
        %v1993 = vshrl.u32 %v1975, %v1991
        %v1994 = vor.u32 %v1992, %v1993
        %v1995 = vsub.s32 4294967266, %v1990
        %v1996 = vadd.s32 %v1995, 127
        %v1997 = vshll.u32 %v1996, 23
        %v1998 = vor.u32 4788187, %v1997
        %v1999 = vand.u32 2147483647, %v1998
        %v2001 = vcvt.s32.f32 %v1994
        %v2002 = vmul.f32 %v2001, %v1999
        %v2003 = vxor.u32 %v2002, 2147483648
        %v2004 = vsel %vm1921, %v2003, %v2002
        %v2005 = vsub.s32 4, %v1981
        %v2006 = vsel %vm1921, %v2005, %v1981
        %v2007 = vsel %vm1920, %v1813, %v2004
        %v2008 = vsel %vm1920, 0, %v2006
        %v2009 = vcosq.f32.pop %v2007
        %v2010 = vsinq.f32.pop %v2007
        %vm2011 = vweird.f32 %v1813
        %v2012 = vand.u32 %v2008, 3
        %vm2013 = vcmp.lt.s32.totalorder %v2012, 2
        %vm2014 = vcmp.eq.s32.totalorder %v2012, 0
        %v2015 = vxor.u32 %v2010, 2147483648
        %v2016 = vsel %vm2014, %v2009, %v2015
        %vm2017 = vcmp.eq.s32.totalorder %v2012, 2
        %v2018 = vxor.u32 %v2009, 2147483648
        %v2019 = vsel %vm2017, %v2018, %v2010
        %v2020 = vsel %vm2013, %v2016, %v2019
        %v2021 = vsel %vm2011, nan, %v2020
        %2022 = vst [vmem:[%s131 + $0x36] sm:$0x7] %v2021
        %v2023 = vmul.f32 %v132, 512.0
        %v2024 = vand.u32 2147483647, %v2023
        %vm2025 = vcmp.le.f32.partialorder %v2024, 0.7853982
        %vm2026 = vcmp.lt.s32.totalorder %v2023, 0
        %v2027 = vand.u32 %v2023, 2139095040
        %v2028 = vshrl.u32 %v2027, 23
        %v2029 = vsub.s32 %v2028, 127
        %v2030 = vand.u32 2147483647, %v2023
        %v2031 = vand.u32 %v2030, 8388607
        %v2032 = vor.u32 %v2031, 8388608
        %v2033 = vsub.s32 0, %v2032
        %v2034 = vadd.s32 %v2029, 1
        %vm2035 = vcmp.gt.s32.totalorder %v2034, 0
        %v2036 = vsel %vm2035, %v2034, 0
        %v2037 = vshrl.u32 %v2036, 5
        %v2038 = vand.u32 %v2036, 31
        %v2039 = vsub.s32 32, %v2038
        %v2040 = vshrl.u32 683565275, %v2039
        %v2041 = vshll.u32 683565275, %v2038
        %v2042 = vshrl.u32 2475754826, %v2039
        %v2043 = vor.u32 %v2041, %v2042
        %v2044 = vshll.u32 2475754826, %v2038
        %v2045 = vshrl.u32 2131351028, %v2039
        %v2046 = vor.u32 %v2044, %v2045
        %v2047 = vshll.u32 2131351028, %v2038
        %v2048 = vshrl.u32 2102212464, %v2039
        %v2049 = vor.u32 %v2047, %v2048
        %v2050 = vshll.u32 2102212464, %v2038
        %v2051 = vshrl.u32 920167782, %v2039
        %v2052 = vor.u32 %v2050, %v2051
        %v2053 = vshll.u32 920167782, %v2038
        %v2054 = vshrl.u32 1326507024, %v2039
        %v2055 = vor.u32 %v2053, %v2054
        %vm2056 = vcmp.lt.s32.totalorder %v2037, 1
        %vm2057 = vcmp.lt.s32.totalorder %v2037, 2
        %vm2058 = vcmp.lt.s32.totalorder %v2037, 3
        %vm2059 = vcmp.lt.s32.totalorder %v2037, 4
        %v2060 = vsel %vm2056, %v2040, %v2043
        %v2061 = vsel %vm2059, %v2049, 2102212464
        %v2062 = vsel %vm2058, %v2046, %v2061
        %v2063 = vsel %vm2057, %v2060, %v2062
        %v2064 = vsel %vm2056, %v2043, %v2046
        %v2065 = vsel %vm2059, %v2052, 920167782
        %v2066 = vsel %vm2058, %v2049, %v2065
        %v2067 = vsel %vm2057, %v2064, %v2066
        %v2068 = vsel %vm2056, %v2046, %v2049
        %v2069 = vsel %vm2059, %v2055, 1326507024
        %v2070 = vsel %vm2058, %v2052, %v2069
        %v2071 = vsel %vm2057, %v2068, %v2070
        %v2072 = vshll.u32 %v2032, 8
        %v2073 = vmul.u32.u64.compose %v2072, %v2071
        %v2074 = vextract.low.u32 %v2073
        %v2075 = vextract.high.u32 %v2073
        %v2076 = vmul.u32.u64.compose %v2072, %v2067
        %v2077 = vextract.low.u32 %v2076
        %v2078 = vextract.high.u32 %v2076
        %v2079 = vmul.u32 %v2072, %v2063
        %v2080 = vadd.s32 %v2075, %v2077
        %vm2081 = vc.u32 %v2075, %v2077
        %v2082 = vadd.s32 %v2078, 1
        %v2083 = vsel %vm2081, %v2082, %v2078
        %v2084 = vadd.s32 %v2079, %v2083
        %v2085 = vadd.s32 %v2084, 536870912
        %v2086 = vshrl.u32 %v2085, 30
        %v2087 = vshll.u32 %v2086, 30
        %v2088 = vsub.s32 %v2084, %v2087
        %vm2089 = vcmp.lt.s32.totalorder %v2088, 0
        %v2090 = vsub.s32 0, %v2088
        %v2091 = vsel %vm2089, %v2090, %v2088
        %v2092 = vclz %v2091
        %v2093 = vsub.s32 %v2092, 2
        %vm2094 = vcmp.gt.s32.totalorder 0, %v2093
        %v2095 = vsel %vm2094, 0, %v2093
        %v2096 = vsub.s32 32, %v2095
        %v2097 = vshll.u32 %v2088, %v2095
        %v2098 = vshrl.u32 %v2080, %v2096
        %v2099 = vor.u32 %v2097, %v2098
        %v2100 = vsub.s32 4294967266, %v2095
        %v2101 = vadd.s32 %v2100, 127
        %v2102 = vshll.u32 %v2101, 23
        %v2103 = vor.u32 4788187, %v2102
        %v2104 = vand.u32 2147483647, %v2103
        %v2106 = vcvt.s32.f32 %v2099
        %v2107 = vmul.f32 %v2106, %v2104
        %v2108 = vxor.u32 %v2107, 2147483648
        %v2109 = vsel %vm2026, %v2108, %v2107
        %v2110 = vsub.s32 4, %v2086
        %v2111 = vsel %vm2026, %v2110, %v2086
        %v2112 = vsel %vm2025, %v2023, %v2109
        %v2113 = vsel %vm2025, 0, %v2111
        %v2114 = vcosq.f32.pop %v2112
        %v2115 = vsinq.f32.pop %v2112
        %vm2116 = vweird.f32 %v2023
        %v2117 = vadd.s32 %v2113, 3
        %v2118 = vand.u32 %v2117, 3
        %vm2119 = vcmp.lt.s32.totalorder %v2118, 2
        %vm2120 = vcmp.eq.s32.totalorder %v2118, 0
        %v2121 = vxor.u32 %v2115, 2147483648
        %v2122 = vsel %vm2120, %v2114, %v2121
        %vm2123 = vcmp.eq.s32.totalorder %v2118, 2
        %v2124 = vxor.u32 %v2114, 2147483648
        %v2125 = vsel %vm2123, %v2124, %v2115
        %v2126 = vsel %vm2119, %v2122, %v2125
        %v2127 = vsel %vm2116, nan, %v2126
        %2128 = vst [vmem:[%s131 + $0x39] sm:$0x7] %v2127
        %v2129 = vand.u32 2147483647, %v2023
        %vm2130 = vcmp.le.f32.partialorder %v2129, 0.7853982
        %vm2131 = vcmp.lt.s32.totalorder %v2023, 0
        %v2132 = vand.u32 %v2023, 2139095040
        %v2133 = vshrl.u32 %v2132, 23
        %v2134 = vsub.s32 %v2133, 127
        %v2135 = vand.u32 2147483647, %v2023
        %v2136 = vand.u32 %v2135, 8388607
        %v2137 = vor.u32 %v2136, 8388608
        %v2138 = vsub.s32 0, %v2137
        %v2139 = vadd.s32 %v2134, 1
        %vm2140 = vcmp.gt.s32.totalorder %v2139, 0
        %v2141 = vsel %vm2140, %v2139, 0
        %v2142 = vshrl.u32 %v2141, 5
        %v2143 = vand.u32 %v2141, 31
        %v2144 = vsub.s32 32, %v2143
        %v2145 = vshrl.u32 683565275, %v2144
        %v2146 = vshll.u32 683565275, %v2143
        %v2147 = vshrl.u32 2475754826, %v2144
        %v2148 = vor.u32 %v2146, %v2147
        %v2149 = vshll.u32 2475754826, %v2143
        %v2150 = vshrl.u32 2131351028, %v2144
        %v2151 = vor.u32 %v2149, %v2150
        %v2152 = vshll.u32 2131351028, %v2143
        %v2153 = vshrl.u32 2102212464, %v2144
        %v2154 = vor.u32 %v2152, %v2153
        %v2155 = vshll.u32 2102212464, %v2143
        %v2156 = vshrl.u32 920167782, %v2144
        %v2157 = vor.u32 %v2155, %v2156
        %v2158 = vshll.u32 920167782, %v2143
        %v2159 = vshrl.u32 1326507024, %v2144
        %v2160 = vor.u32 %v2158, %v2159
        %vm2161 = vcmp.lt.s32.totalorder %v2142, 1
        %vm2162 = vcmp.lt.s32.totalorder %v2142, 2
        %vm2163 = vcmp.lt.s32.totalorder %v2142, 3
        %vm2164 = vcmp.lt.s32.totalorder %v2142, 4
        %v2165 = vsel %vm2161, %v2145, %v2148
        %v2166 = vsel %vm2164, %v2154, 2102212464
        %v2167 = vsel %vm2163, %v2151, %v2166
        %v2168 = vsel %vm2162, %v2165, %v2167
        %v2169 = vsel %vm2161, %v2148, %v2151
        %v2170 = vsel %vm2164, %v2157, 920167782
        %v2171 = vsel %vm2163, %v2154, %v2170
        %v2172 = vsel %vm2162, %v2169, %v2171
        %v2173 = vsel %vm2161, %v2151, %v2154
        %v2174 = vsel %vm2164, %v2160, 1326507024
        %v2175 = vsel %vm2163, %v2157, %v2174
        %v2176 = vsel %vm2162, %v2173, %v2175
        %v2177 = vshll.u32 %v2137, 8
        %v2178 = vmul.u32.u64.compose %v2177, %v2176
        %v2179 = vextract.low.u32 %v2178
        %v2180 = vextract.high.u32 %v2178
        %v2181 = vmul.u32.u64.compose %v2177, %v2172
        %v2182 = vextract.low.u32 %v2181
        %v2183 = vextract.high.u32 %v2181
        %v2184 = vmul.u32 %v2177, %v2168
        %v2185 = vadd.s32 %v2180, %v2182
        %vm2186 = vc.u32 %v2180, %v2182
        %v2187 = vadd.s32 %v2183, 1
        %v2188 = vsel %vm2186, %v2187, %v2183
        %v2189 = vadd.s32 %v2184, %v2188
        %v2190 = vadd.s32 %v2189, 536870912
        %v2191 = vshrl.u32 %v2190, 30
        %v2192 = vshll.u32 %v2191, 30
        %v2193 = vsub.s32 %v2189, %v2192
        %vm2194 = vcmp.lt.s32.totalorder %v2193, 0
        %v2195 = vsub.s32 0, %v2193
        %v2196 = vsel %vm2194, %v2195, %v2193
        %v2197 = vclz %v2196
        %v2198 = vsub.s32 %v2197, 2
        %vm2199 = vcmp.gt.s32.totalorder 0, %v2198
        %v2200 = vsel %vm2199, 0, %v2198
        %v2201 = vsub.s32 32, %v2200
        %v2202 = vshll.u32 %v2193, %v2200
        %v2203 = vshrl.u32 %v2185, %v2201
        %v2204 = vor.u32 %v2202, %v2203
        %v2205 = vsub.s32 4294967266, %v2200
        %v2206 = vadd.s32 %v2205, 127
        %v2207 = vshll.u32 %v2206, 23
        %v2208 = vor.u32 4788187, %v2207
        %v2209 = vand.u32 2147483647, %v2208
        %v2211 = vcvt.s32.f32 %v2204
        %v2212 = vmul.f32 %v2211, %v2209
        %v2213 = vxor.u32 %v2212, 2147483648
        %v2214 = vsel %vm2131, %v2213, %v2212
        %v2215 = vsub.s32 4, %v2191
        %v2216 = vsel %vm2131, %v2215, %v2191
        %v2217 = vsel %vm2130, %v2023, %v2214
        %v2218 = vsel %vm2130, 0, %v2216
        %v2219 = vcosq.f32.pop %v2217
        %v2220 = vsinq.f32.pop %v2217
        %vm2221 = vweird.f32 %v2023
        %v2222 = vand.u32 %v2218, 3
        %vm2223 = vcmp.lt.s32.totalorder %v2222, 2
        %vm2224 = vcmp.eq.s32.totalorder %v2222, 0
        %v2225 = vxor.u32 %v2220, 2147483648
        %v2226 = vsel %vm2224, %v2219, %v2225
        %vm2227 = vcmp.eq.s32.totalorder %v2222, 2
        %v2228 = vxor.u32 %v2219, 2147483648
        %v2229 = vsel %vm2227, %v2228, %v2220
        %v2230 = vsel %vm2223, %v2226, %v2229
        %v2231 = vsel %vm2221, nan, %v2230
        %2232 = vst [vmem:[%s131 + $0x3c] sm:$0x7] %v2231
        %s2233 = sand.u32 %s52, 1
        %s2234 = scalar_lea.sflag [#allocation4], %s2233
        %s2235 = sand.u32 %s52, 1
        %s2236 = smul.addr %s2235, 64
        %s2237 = scalar_lea.vmem [#allocation5], %s2236
        // Predicated region
        $region29: #{tpu_custom_call.1} parent=23 // pred_check
          %p2238 = pneg %p62
        $region30: #{tpu_custom_call.1} parent=23 // pred_check_branch
          %2240 = sbr.rel (%p2238) target = $region32
        $region31: #{tpu_custom_call.1} parent=23 // pred_region
          %s2242 = ssub.s32 1024, 1024
          %2243 = vsyncadd %s2234, %s2242
          %s2244 = smul.addr %s18, 128
          %s2245 = scalar_lea.hbm %s1, %s2244
          %s2246 = sshll.u32 %s2237, 4
          %s2247 = int_to_ptr.vmem [resolvable:$true] %s2246
          %2252 = dma.vmem_to_hbm [thread:$0]  %s2247, 1024, %s2245, %s2234, 128, 256, 8
        $region32: #{tpu_custom_call.1} parent=23 // pred_fallthru
          _
      $region24: #{tpu_custom_call.1} parent=5 // pred_fallthru
        _
      %p2253 = scmp.le.s32.totalorder 2, %s13
      // Predicated region
      $region33: #{tpu_custom_call.1} parent=5 // pred_check
        %p2254 = pneg %p2253
      $region34: #{tpu_custom_call.1} parent=5 // pred_check_branch
        %2256 = sbr.rel (%p2254) target = $region36
      $region35: #{tpu_custom_call.1} parent=5 // pred_region
        %s2257 = ssub.s32 %s13, 2
        // Predicated region
        $region37: #{tpu_custom_call.1} parent=35 // pred_check
          %p2258 = pneg %p68
        $region38: #{tpu_custom_call.1} parent=35 // pred_check_branch
          %2260 = sbr.rel (%p2258) target = $region40
        $region39: #{tpu_custom_call.1} parent=35 // pred_region
          %s2261 = sand.u32 %s53, 1
          %s2262 = scalar_lea.sflag [#allocation4], %s2261
          %s2263 = sand.u32 %s53, 1
          %s2264 = smul.addr %s2263, 64
          %s2265 = scalar_lea.vmem [#allocation5], %s2264
          %2266 = dma.done %s2262, 1024
        $region40: #{tpu_custom_call.1} parent=35 // pred_fallthru
          _
      $region36: #{tpu_custom_call.1} parent=5 // pred_fallthru
        _
    $region6: #{tpu_custom_call.1} parent=1 // loop_footer
      %s17 = sadd.s32 1, %s13
    $region7: #{tpu_custom_call.1} parent=1 // loop_footer_branch
      %12 = sbr.rel target = $region3
    $region8: #{tpu_custom_call.1} parent=1 // loop_exit
      _
    %2267 = vsyncpa [#allocation3], 1
    %s2268 = scalar_lea.sflag [#allocation3], 1
    %2269 = vsyncpa %s2268, 1
    %2270 = vsyncpa [#allocation4], 1
    %s2271 = scalar_lea.sflag [#allocation4], 1
    %2272 = vsyncpa %s2271, 1

</llo_original>
